<compile_context>
chip_gen: v7x
topology: tpu7x:2x2x1
jax: 0.10.0
libtpu: 0.0.40
codegen_flags: <defaults>
</compile_context>

<pallas_src>
import functools

import numpy as np
import jax
import jax.numpy as jnp
from jax.experimental import pallas as pl
from jax.experimental.pallas import tpu as pltpu


def _enn_kernel(h_ref, x_ref, mrow_ref, mcol_ref,
                wab_ref, wc_ref, be1_ref,
                wmsg_ref, be2_ref,
                wix_ref, bix_ref,
                wx2t_ref, bx2_ref,
                wh1_ref, bh1_ref,
                wh2_ref, bh2_ref,
                woutt_ref, bout_ref,
                out_ref, *, n_layers):
    Bb, N, D = h_ref.shape
    BN = Bb * N
    BNN = Bb * N * N

    Hf = h_ref[...].reshape(BN, D)          # (BN, D) node features, f32
    X = x_ref[...]                          # (Bb, N, 8) coords (lane-padded), f32
    mrow = mrow_ref[...]                    # (Bb, 1, N)
    mcol = mcol_ref[...]                    # (Bb, N, 1)

    # ---- loop-invariant values (hoisted out of the layer loop) ----
    msq = mcol * mrow                       # (Bb, N, N) pairwise mask
    msq4 = msq[:, :, :, None]               # (Bb, N, N, 1)
    mcol_flat = mcol.reshape(BN, 1)         # (BN, 1)
    eye = (jax.lax.broadcasted_iota(jnp.int32, (N, N), 0) ==
           jax.lax.broadcasted_iota(jnp.int32, (N, N), 1)).astype(jnp.float32)

    Wab = wab_ref[...]                      # (D, 2D)  bf16  [We1_sender | We1_receiver]
    wc = wc_ref[...]                        # (1, D)   f32   (x12 row of We1)
    be1 = be1_ref[...]                      # (1, D)
    Wmsg = wmsg_ref[...]                    # (D, D)   bf16
    be2 = be2_ref[...]                      # (1, D)
    Wix = wix_ref[...]                      # (D, D+1) bf16  [Wx1 | Winf]
    bix = bix_ref[...]                      # (1, D+1)
    wx2t = wx2t_ref[...]                    # (1, D)   f32   (phi_x 2nd linear as a row)
    bx2 = bx2_ref[...]                      # (1, 1)
    Wh1 = wh1_ref[...]                      # (D, D)   bf16
    bh1 = bh1_ref[...]                      # (1, D)
    Wh2 = wh2_ref[...]                      # (D, D)   bf16
    bh2 = bh2_ref[...]                      # (1, D)

    def bdot(a, w_bf16):                    # MXU matmul: bf16 inputs, f32 accumulate
        return jnp.dot(a.astype(jnp.bfloat16), w_bf16,
                       preferred_element_type=jnp.float32)

    def layer(carry):
        Hf, X = carry
        # -- pair squared distances via Gram matrix (no (N,N,3) diff tensor) --
        G = jnp.einsum('bjd,bid->bji', X, X,
                       preferred_element_type=jnp.float32)      # (Bb, N, N)
        sq_j = jnp.sum(G * eye, axis=2, keepdims=True)          # (Bb, N, 1)  ||x_j||^2
        sq_i = jnp.sum(G * eye, axis=1, keepdims=True)          # (Bb, 1, N)  ||x_i||^2
        x12 = (sq_j + sq_i - 2.0 * G) * msq                     # (Bb, N, N)

        # -- phi_e first linear, fused over [H_sender | H_receiver] --
        hab = bdot(Hf, Wab)                                     # (BN, 2D)
        h_send = hab[:, :D].reshape(Bb, N, D)                   # pairs with We1[:D]
        h_recv = (hab[:, D:] + be1).reshape(Bb, N, D)           # pairs with We1[D:2D]
        pre = (h_recv[:, :, None, :] + h_send[:, None, :, :]
               + x12[:, :, :, None] * wc)                       # (Bb, Nj, Ni, D)
        t1 = jnp.tanh(pre).reshape(BNN, D)
        M = jnp.tanh(bdot(t1, Wmsg) + be2)                      # (BNN, D) messages
        # (masked pairs are zeroed exactly where they are consumed, below)

        # -- fused phi_inf gate + phi_x first linear --
        g = bdot(M, Wix) + bix                                  # (BNN, D+1)
        xh = jnp.tanh(g[:, :D])                                 # phi_x hidden
        E = jax.nn.sigmoid(g[:, D:])                            # (BNN, 1) gate

        # -- aggregate messages over senders i (masked) --
        ME = (M * E).reshape(Bb, N, N, D) * msq4
        M2 = jnp.sum(ME, axis=2).reshape(BN, D)                 # (BN, D)

        # -- phi_x 2nd linear as a lane reduce; coordinate update as a matmul --
        px = jnp.tanh(jnp.sum(xh.reshape(Bb, N, N, D) * wx2t, axis=-1) + bx2)
        P = px * msq                                            # (Bb, Nj, Ni)
        upd = jnp.einsum('bji,bid->bjd', P, X,
                         preferred_element_type=jnp.float32)    # sum_i P_ji * x_i
        cs = jnp.sum(P, axis=2, keepdims=True)                  # (Bb, N, 1)
        X_new = X + upd - cs * X

        # -- phi_h node update + residual, re-mask --
        ph = jnp.tanh(bdot(jnp.tanh(bdot(M2, Wh1) + bh1), Wh2) + bh2)
        H_new = (ph + Hf) * mcol_flat
        return H_new, X_new

    if n_layers <= 2:
        for _ in range(n_layers):
            Hf, X = layer((Hf, X))
    else:
        Hf, X = jax.lax.fori_loop(0, n_layers, lambda _, c: layer(c), (Hf, X))

    # -- readout: masked mean over atoms (divides by N, like torch.mean), ReLU, head --
    hbar = jnp.sum((Hf * mcol_flat).reshape(Bb, N, D), axis=1) * (1.0 / N)   # (Bb, D)
    hrelu = jnp.maximum(hbar, 0.0)
    out = jnp.sum(hrelu * woutt_ref[...], axis=-1, keepdims=True) + bout_ref[...]
    out_ref[...] = out.reshape(Bb, 1, 1)


def enn_forward_pallas(params, tokens, coords, mask, *, n_layers=1, block_b=None):
    emb = params["emb"]
    b, N = tokens.shape
    D = emb.shape[1]
    CPAD = 8   # coordinates padded 3 -> 8 lanes

    # Molecules per grid step: amortize per-step overhead; must divide b.
    # (On v7x, pass a smaller block_b to keep >= 2 grid steps for the 2 TensorCores.)
    if block_b is None:
        block_b = min(b, 8)
    block_b = max(1, min(block_b, b))
    while b % block_b:
        block_b -= 1
    nb = b // block_b

    # Embedding lookup + mask prep (plain-JAX glue).
    H0 = jnp.take(emb, tokens, axis=0).astype(jnp.float32)        # (b, N, D)
    m = mask.astype(jnp.float32)
    mrow = m[:, None, :]                                          # (b, 1, N)
    mcol = m[:, :, None]                                          # (b, N, 1)
    Xp = jnp.zeros((b, N, CPAD), jnp.float32).at[:, :, :3].set(
        coords.astype(jnp.float32))

    # Weight prep: fuse shared-LHS matmuls, turn (D,1) heads into rows for VPU
    # reduces, pre-cast MXU weights to bf16 (f32 accumulation inside the kernel).
    we1 = params["we1"]
    wab = jnp.concatenate([we1[:D], we1[D:2 * D]], axis=1).astype(jnp.bfloat16)
    wc = we1[2 * D:]                                              # (1, D)
    wix = jnp.concatenate([params["wx1"], params["winf"]],
                          axis=1).astype(jnp.bfloat16)            # (D, D+1)
    bix = jnp.concatenate([params["bx1"], params["binf"]], axis=1)  # (1, D+1)
    weights = [
        wab, wc, params["be1"],
        params["we2"].astype(jnp.bfloat16), params["be2"],
        wix, bix,
        params["wx2"].T, params["bx2"],
        params["wh1"].astype(jnp.bfloat16), params["bh1"],
        params["wh2"].astype(jnp.bfloat16), params["bh2"],
        params["wout"].T, params["bout"],
    ]

    def full_spec(a):
        nd = a.ndim
        return pl.BlockSpec(a.shape, lambda i, _nd=nd: (0,) * _nd)

    in_specs = [
        pl.BlockSpec((block_b, N, D), lambda i: (i, 0, 0)),       # H0
        pl.BlockSpec((block_b, N, CPAD), lambda i: (i, 0, 0)),    # coords (padded)
        pl.BlockSpec((block_b, 1, N), lambda i: (i, 0, 0)),       # mask row
        pl.BlockSpec((block_b, N, 1), lambda i: (i, 0, 0)),       # mask col
    ] + [full_spec(w) for w in weights]

    # NOTE: for realistic molecule sizes (N >= ~256) the sender axis of the pair
    # block should additionally be tiled with running M2 / coordinate accumulators
    # so the (N^2, D) intermediates fit v7x's 64 MiB VMEM.
    out = pl.pallas_call(
        functools.partial(_enn_kernel, n_layers=n_layers),
        out_shape=jax.ShapeDtypeStruct((b, 1, 1), jnp.float32),
        grid=(nb,),
        in_specs=in_specs,
        out_specs=pl.BlockSpec((block_b, 1, 1), lambda i: (i, 0, 0)),
        compiler_params=pltpu.CompilerParams(
            dimension_semantics=("parallel",)),
    )(H0, Xp, mrow, mcol, *weights)
    return out.reshape(b, 1)


def enn_reference(params, tokens, coords, mask, *, n_layers=1):
    """Pure-JAX replica of the PyTorch forward (for correctness check)."""
    emb = params["emb"]
    H = jnp.take(emb, tokens, axis=0).astype(jnp.float32)
    X = coords.astype(jnp.float32)
    m = mask.astype(jnp.float32)
    b, N, D = H.shape
    msq = (m[:, :, None] * m[:, None, :])[..., None]              # (b, N, N, 1)

    def mlp2(x, w1, b1, w2, b2):
        return jnp.tanh(jnp.tanh(x @ w1 + b1) @ w2 + b2)

    for _ in range(n_layers):
        diff = X[:, :, None, :] - X[:, None, :, :]
        x12 = jnp.sum(diff ** 2 * msq, axis=-1, keepdims=True)
        H1 = jnp.broadcast_to(H[:, :, None, :], (b, N, N, D))
        H2 = jnp.broadcast_to(H[:, None, :, :], (b, N, N, D))
        H12x = jnp.concatenate([H1, H2, x12], axis=-1)
        M = mlp2(H12x, params["we1"], params["be1"],
                 params["we2"], params["be2"]) * msq
        E = jax.nn.sigmoid(M @ params["winf"] + params["binf"])
        M2 = jnp.sum(M * E, axis=1)
        px = mlp2(M, params["wx1"], params["bx1"], params["wx2"], params["bx2"])
        X = X + jnp.sum(diff * msq * px, axis=1)
        H = mlp2(M2, params["wh1"], params["bh1"], params["wh2"], params["bh2"]) + H
        H = H * m[:, :, None]
    H = jnp.mean(H * m[:, :, None], axis=-2)
    H = jax.nn.relu(H)
    return H @ params["wout"] + params["bout"]


def init_params(key, vocab=6, D=32):
    keys = jax.random.split(key, 17)

    def w(k, shape, scale=0.2):
        return (scale * jax.random.normal(k, shape)).astype(jnp.float32)

    return dict(
        emb=w(keys[0], (vocab, D), 0.5),
        we1=w(keys[1], (2 * D + 1, D)), be1=w(keys[2], (1, D)),
        we2=w(keys[3], (D, D)),         be2=w(keys[4], (1, D)),
        winf=w(keys[5], (D, 1)),        binf=w(keys[6], (1, 1)),
        wx1=w(keys[7], (D, D)),         bx1=w(keys[8], (1, D)),
        wx2=w(keys[9], (D, 1)),         bx2=w(keys[10], (1, 1)),
        wh1=w(keys[11], (D, D)),        bh1=w(keys[12], (1, D)),
        wh2=w(keys[13], (D, D)),        bh2=w(keys[14], (1, D)),
        wout=w(keys[15], (D, 1)),       bout=w(keys[16], (1, 1)),
    )


if __name__ == "__main__":
    b, N, D, vocab = 2, 8, 32, 6
    key = jax.random.PRNGKey(0)
    kp, kt, kc, km = jax.random.split(key, 4)

    params = init_params(kp, vocab=vocab, D=D)
    tokens = jax.random.randint(kt, (b, N), 0, vocab)
    coords = jax.random.normal(kc, (b, N, 3), dtype=jnp.float32)
    mask = (jax.random.uniform(km, (b, N)) > 0.25).astype(jnp.float32)
    mask = mask.at[:, 0].set(1.0)   # ensure at least one valid atom per example

    out = enn_forward_pallas(params, tokens, coords, mask, n_layers=1)
    out = jax.block_until_ready(out)

    ref = enn_reference(params, tokens, coords, mask, n_layers=1)
    # bf16 MXU inputs (f32 accumulation) -> slightly looser tolerance than pure f32.
    np.testing.assert_allclose(np.asarray(out), np.asarray(ref), rtol=2e-2, atol=2e-2)

    print("KERNEL_OK")
</pallas_src>

<mosaic_0001>
module attributes {stable_mosaic.version = 11 : i64} {
  func.func @_enn_kernel(%arg0: i32, %arg1: memref<2x8x32xf32, #tpu.memory_space<vmem>>, %arg2: memref<2x8x8xf32, #tpu.memory_space<vmem>>, %arg3: memref<2x1x8xf32, #tpu.memory_space<vmem>>, %arg4: memref<2x8x1xf32, #tpu.memory_space<vmem>>, %arg5: memref<32x64xbf16, #tpu.memory_space<vmem>>, %arg6: memref<1x32xf32, #tpu.memory_space<vmem>>, %arg7: memref<1x32xf32, #tpu.memory_space<vmem>>, %arg8: memref<32x32xbf16, #tpu.memory_space<vmem>>, %arg9: memref<1x32xf32, #tpu.memory_space<vmem>>, %arg10: memref<32x33xbf16, #tpu.memory_space<vmem>>, %arg11: memref<1x33xf32, #tpu.memory_space<vmem>>, %arg12: memref<1x32xf32, #tpu.memory_space<vmem>>, %arg13: memref<1x1xf32, #tpu.memory_space<vmem>>, %arg14: memref<32x32xbf16, #tpu.memory_space<vmem>>, %arg15: memref<1x32xf32, #tpu.memory_space<vmem>>, %arg16: memref<32x32xbf16, #tpu.memory_space<vmem>>, %arg17: memref<1x32xf32, #tpu.memory_space<vmem>>, %arg18: memref<1x32xf32, #tpu.memory_space<vmem>>, %arg19: memref<1x1xf32, #tpu.memory_space<vmem>>, %arg20: memref<2x1x1xf32, #tpu.memory_space<vmem>>) attributes {dimension_semantics = [#tpu.dimension_semantics<parallel>], iteration_bounds = array<i64: 1>, scalar_prefetch = 0 : i64, scratch_operands = 0 : i64, tpu.core_type = #tpu.core_type<tc>, window_params = [{transform_indices = @transform_0, window_bounds = array<i64: 2, 8, 32>}, {transform_indices = @transform_1, window_bounds = array<i64: 2, 8, 8>}, {transform_indices = @transform_2, window_bounds = array<i64: 2, 1, 8>}, {transform_indices = @transform_3, window_bounds = array<i64: 2, 8, 1>}, {pipeline_mode = #tpu.pipeline_mode<synchronous>, transform_indices = @transform_4, window_bounds = array<i64: 32, 64>}, {pipeline_mode = #tpu.pipeline_mode<synchronous>, transform_indices = @transform_5, window_bounds = array<i64: 1, 32>}, {pipeline_mode = #tpu.pipeline_mode<synchronous>, transform_indices = @transform_6, window_bounds = array<i64: 1, 32>}, {pipeline_mode = #tpu.pipeline_mode<synchronous>, transform_indices = @transform_7, window_bounds = array<i64: 32, 32>}, {pipeline_mode = #tpu.pipeline_mode<synchronous>, transform_indices = @transform_8, window_bounds = array<i64: 1, 32>}, {pipeline_mode = #tpu.pipeline_mode<synchronous>, transform_indices = @transform_9, window_bounds = array<i64: 32, 33>}, {pipeline_mode = #tpu.pipeline_mode<synchronous>, transform_indices = @transform_10, window_bounds = array<i64: 1, 33>}, {pipeline_mode = #tpu.pipeline_mode<synchronous>, transform_indices = @transform_11, window_bounds = array<i64: 1, 32>}, {pipeline_mode = #tpu.pipeline_mode<synchronous>, transform_indices = @transform_12, window_bounds = array<i64: 1, 1>}, {pipeline_mode = #tpu.pipeline_mode<synchronous>, transform_indices = @transform_13, window_bounds = array<i64: 32, 32>}, {pipeline_mode = #tpu.pipeline_mode<synchronous>, transform_indices = @transform_14, window_bounds = array<i64: 1, 32>}, {pipeline_mode = #tpu.pipeline_mode<synchronous>, transform_indices = @transform_15, window_bounds = array<i64: 32, 32>}, {pipeline_mode = #tpu.pipeline_mode<synchronous>, transform_indices = @transform_16, window_bounds = array<i64: 1, 32>}, {pipeline_mode = #tpu.pipeline_mode<synchronous>, transform_indices = @transform_17, window_bounds = array<i64: 1, 32>}, {pipeline_mode = #tpu.pipeline_mode<synchronous>, transform_indices = @transform_18, window_bounds = array<i64: 1, 1>}, {transform_indices = @transform_19, window_bounds = array<i64: 2, 1, 1>}]} {
    %c0 = arith.constant 0 : index
    %c0_0 = arith.constant 0 : index
    %c0_1 = arith.constant 0 : index
    %0 = vector.load %arg1[%c0, %c0_0, %c0_1] : memref<2x8x32xf32, #tpu.memory_space<vmem>>, vector<2x8x32xf32>
    %1 = vector.shape_cast %0 : vector<2x8x32xf32> to vector<16x32xf32>
    %c0_2 = arith.constant 0 : index
    %c0_3 = arith.constant 0 : index
    %c0_4 = arith.constant 0 : index
    %2 = vector.load %arg2[%c0_2, %c0_3, %c0_4] : memref<2x8x8xf32, #tpu.memory_space<vmem>>, vector<2x8x8xf32>
    %c0_5 = arith.constant 0 : index
    %c0_6 = arith.constant 0 : index
    %c0_7 = arith.constant 0 : index
    %3 = vector.load %arg3[%c0_5, %c0_6, %c0_7] : memref<2x1x8xf32, #tpu.memory_space<vmem>>, vector<2x1x8xf32>
    %c0_8 = arith.constant 0 : index
    %c0_9 = arith.constant 0 : index
    %c0_10 = arith.constant 0 : index
    %4 = vector.load %arg4[%c0_8, %c0_9, %c0_10] : memref<2x8x1xf32, #tpu.memory_space<vmem>>, vector<2x8x1xf32>
    %5 = vector.broadcast %4 : vector<2x8x1xf32> to vector<2x8x8xf32>
    %6 = vector.broadcast %3 : vector<2x1x8xf32> to vector<2x8x8xf32>
    %7 = arith.mulf %5, %6 : vector<2x8x8xf32>
    %8 = vector.shape_cast %7 : vector<2x8x8xf32> to vector<2x8x8x1xf32>
    %9 = vector.shape_cast %4 : vector<2x8x1xf32> to vector<16x1xf32>
    %10 = tpu.iota {dimensions = array<i32: 0>} : vector<8x8xi32>
    %11 = tpu.iota {dimensions = array<i32: 1>} : vector<8x8xi32>
    %12 = arith.cmpi eq, %10, %11 : vector<8x8xi32>
    %13 = arith.extui %12 : vector<8x8xi1> to vector<8x8xi32>
    %14 = arith.sitofp %13 : vector<8x8xi32> to vector<8x8xf32>
    %c0_11 = arith.constant 0 : index
    %c0_12 = arith.constant 0 : index
    %15 = vector.load %arg5[%c0_11, %c0_12] : memref<32x64xbf16, #tpu.memory_space<vmem>>, vector<32x64xbf16>
    %c0_13 = arith.constant 0 : index
    %c0_14 = arith.constant 0 : index
    %16 = vector.load %arg6[%c0_13, %c0_14] : memref<1x32xf32, #tpu.memory_space<vmem>>, vector<1x32xf32>
    %c0_15 = arith.constant 0 : index
    %c0_16 = arith.constant 0 : index
    %17 = vector.load %arg7[%c0_15, %c0_16] : memref<1x32xf32, #tpu.memory_space<vmem>>, vector<1x32xf32>
    %c0_17 = arith.constant 0 : index
    %c0_18 = arith.constant 0 : index
    %18 = vector.load %arg8[%c0_17, %c0_18] : memref<32x32xbf16, #tpu.memory_space<vmem>>, vector<32x32xbf16>
    %c0_19 = arith.constant 0 : index
    %c0_20 = arith.constant 0 : index
    %19 = vector.load %arg9[%c0_19, %c0_20] : memref<1x32xf32, #tpu.memory_space<vmem>>, vector<1x32xf32>
    %c0_21 = arith.constant 0 : index
    %c0_22 = arith.constant 0 : index
    %20 = vector.load %arg10[%c0_21, %c0_22] : memref<32x33xbf16, #tpu.memory_space<vmem>>, vector<32x33xbf16>
    %c0_23 = arith.constant 0 : index
    %c0_24 = arith.constant 0 : index
    %21 = vector.load %arg11[%c0_23, %c0_24] : memref<1x33xf32, #tpu.memory_space<vmem>>, vector<1x33xf32>
    %c0_25 = arith.constant 0 : index
    %c0_26 = arith.constant 0 : index
    %22 = vector.load %arg14[%c0_25, %c0_26] : memref<32x32xbf16, #tpu.memory_space<vmem>>, vector<32x32xbf16>
    %c0_27 = arith.constant 0 : index
    %c0_28 = arith.constant 0 : index
    %23 = vector.load %arg15[%c0_27, %c0_28] : memref<1x32xf32, #tpu.memory_space<vmem>>, vector<1x32xf32>
    %c0_29 = arith.constant 0 : index
    %c0_30 = arith.constant 0 : index
    %24 = vector.load %arg16[%c0_29, %c0_30] : memref<32x32xbf16, #tpu.memory_space<vmem>>, vector<32x32xbf16>
    %c0_31 = arith.constant 0 : index
    %c0_32 = arith.constant 0 : index
    %25 = vector.load %arg17[%c0_31, %c0_32] : memref<1x32xf32, #tpu.memory_space<vmem>>, vector<1x32xf32>
    "tpu.trace_start"() <{level = 10 : i32, message = "bjd,bid->bji"}> : () -> ()
    %cst = arith.constant dense<0.000000e+00> : vector<2x8x8xf32>
    %26 = tpu.matmul %2, %2, %cst {dimension_numbers = #tpu.dot_dimension_numbers<[2], [2], [1], [1], [0, 0, 0, 1, 1, 1], [0], [0]>} : vector<2x8x8xf32>, vector<2x8x8xf32>, vector<2x8x8xf32> -> vector<2x8x8xf32>
    "tpu.trace_stop"() : () -> ()
    %27 = vector.shape_cast %14 : vector<8x8xf32> to vector<1x8x8xf32>
    %28 = vector.broadcast %27 : vector<1x8x8xf32> to vector<2x8x8xf32>
    %29 = arith.mulf %26, %28 : vector<2x8x8xf32>
    %cst_33 = arith.constant dense<0.000000e+00> : vector<2x8xf32>
    %30 = vector.multi_reduction <add>, %29, %cst_33 [2] : vector<2x8x8xf32> to vector<2x8xf32>
    %31 = vector.shape_cast %30 : vector<2x8xf32> to vector<2x8x1xf32>
    %32 = vector.shape_cast %14 : vector<8x8xf32> to vector<1x8x8xf32>
    %33 = vector.broadcast %32 : vector<1x8x8xf32> to vector<2x8x8xf32>
    %34 = arith.mulf %26, %33 : vector<2x8x8xf32>
    %cst_34 = arith.constant dense<0.000000e+00> : vector<2x8xf32>
    %35 = vector.multi_reduction <add>, %34, %cst_34 [1] : vector<2x8x8xf32> to vector<2x8xf32>
    %36 = vector.shape_cast %35 : vector<2x8xf32> to vector<2x1x8xf32>
    %37 = vector.broadcast %31 : vector<2x8x1xf32> to vector<2x8x8xf32>
    %38 = vector.broadcast %36 : vector<2x1x8xf32> to vector<2x8x8xf32>
    %39 = arith.addf %37, %38 : vector<2x8x8xf32>
    %cst_35 = arith.constant 2.000000e+00 : f32
    %40 = vector.broadcast %cst_35 : f32 to vector<2x8x8xf32>
    %41 = arith.mulf %40, %26 : vector<2x8x8xf32>
    %42 = arith.subf %39, %41 : vector<2x8x8xf32>
    %43 = arith.mulf %42, %7 : vector<2x8x8xf32>
    %44 = arith.truncf %1 : vector<16x32xf32> to vector<16x32xbf16>
    %cst_36 = arith.constant dense<0.000000e+00> : vector<16x64xf32>
    %45 = tpu.matmul %44, %15, %cst_36 {dimension_numbers = #tpu.dot_dimension_numbers<[1], [0], [0], [1], [0, 0, 1, 1], [], []>} : vector<16x32xbf16>, vector<32x64xbf16>, vector<16x64xf32> -> vector<16x64xf32>
    %46 = vector.extract_strided_slice %45 {offsets = [0, 0], sizes = [16, 32], strides = [1, 1]} : vector<16x64xf32> to vector<16x32xf32>
    %47 = vector.shape_cast %46 : vector<16x32xf32> to vector<2x8x32xf32>
    %48 = vector.extract_strided_slice %45 {offsets = [0, 32], sizes = [16, 32], strides = [1, 1]} : vector<16x64xf32> to vector<16x32xf32>
    %49 = vector.broadcast %17 : vector<1x32xf32> to vector<16x32xf32>
    %50 = arith.addf %48, %49 : vector<16x32xf32>
    %51 = vector.shape_cast %50 : vector<16x32xf32> to vector<2x8x32xf32>
    %52 = vector.shape_cast %51 : vector<2x8x32xf32> to vector<2x8x1x32xf32>
    %53 = vector.shape_cast %47 : vector<2x8x32xf32> to vector<2x1x8x32xf32>
    %54 = vector.broadcast %52 : vector<2x8x1x32xf32> to vector<2x8x8x32xf32>
    %55 = vector.broadcast %53 : vector<2x1x8x32xf32> to vector<2x8x8x32xf32>
    %56 = arith.addf %54, %55 : vector<2x8x8x32xf32>
    %57 = vector.shape_cast %43 : vector<2x8x8xf32> to vector<2x8x8x1xf32>
    %58 = vector.shape_cast %16 : vector<1x32xf32> to vector<1x1x1x32xf32>
    %59 = vector.broadcast %57 : vector<2x8x8x1xf32> to vector<2x8x8x32xf32>
    %60 = vector.broadcast %58 : vector<1x1x1x32xf32> to vector<2x8x8x32xf32>
    %61 = arith.mulf %59, %60 : vector<2x8x8x32xf32>
    %62 = arith.addf %56, %61 : vector<2x8x8x32xf32>
    %63 = math.tanh %62 : vector<2x8x8x32xf32>
    %64 = vector.shape_cast %63 : vector<2x8x8x32xf32> to vector<128x32xf32>
    %65 = arith.truncf %64 : vector<128x32xf32> to vector<128x32xbf16>
    %cst_37 = arith.constant dense<0.000000e+00> : vector<128x32xf32>
    %66 = tpu.matmul %65, %18, %cst_37 {dimension_numbers = #tpu.dot_dimension_numbers<[1], [0], [0], [1], [0, 0, 1, 1], [], []>} : vector<128x32xbf16>, vector<32x32xbf16>, vector<128x32xf32> -> vector<128x32xf32>
    %67 = vector.broadcast %19 : vector<1x32xf32> to vector<128x32xf32>
    %68 = arith.addf %66, %67 : vector<128x32xf32>
    %69 = math.tanh %68 : vector<128x32xf32>
    %70 = arith.truncf %69 : vector<128x32xf32> to vector<128x32xbf16>
    %cst_38 = arith.constant dense<0.000000e+00> : vector<128x33xf32>
    %71 = tpu.matmul %70, %20, %cst_38 {dimension_numbers = #tpu.dot_dimension_numbers<[1], [0], [0], [1], [0, 0, 1, 1], [], []>} : vector<128x32xbf16>, vector<32x33xbf16>, vector<128x33xf32> -> vector<128x33xf32>
    %72 = vector.broadcast %21 : vector<1x33xf32> to vector<128x33xf32>
    %73 = arith.addf %71, %72 : vector<128x33xf32>
    %74 = vector.extract_strided_slice %73 {offsets = [0, 32], sizes = [128, 1], strides = [1, 1]} : vector<128x33xf32> to vector<128x1xf32>
    %75 = arith.negf %74 : vector<128x1xf32>
    %76 = math.exp %75 : vector<128x1xf32>
    %cst_39 = arith.constant 1.000000e+00 : f32
    %77 = vector.broadcast %cst_39 : f32 to vector<128x1xf32>
    %78 = arith.addf %77, %76 : vector<128x1xf32>
    %79 = arith.divf %77, %78 : vector<128x1xf32>
    %80 = vector.broadcast %79 : vector<128x1xf32> to vector<128x32xf32>
    %81 = arith.mulf %69, %80 : vector<128x32xf32>
    %82 = vector.shape_cast %81 : vector<128x32xf32> to vector<2x8x8x32xf32>
    %83 = vector.broadcast %8 : vector<2x8x8x1xf32> to vector<2x8x8x32xf32>
    %84 = arith.mulf %82, %83 : vector<2x8x8x32xf32>
    %cst_40 = arith.constant dense<0.000000e+00> : vector<2x8x32xf32>
    %85 = vector.multi_reduction <add>, %84, %cst_40 [2] : vector<2x8x8x32xf32> to vector<2x8x32xf32>
    %86 = vector.shape_cast %85 : vector<2x8x32xf32> to vector<16x32xf32>
    %87 = arith.truncf %86 : vector<16x32xf32> to vector<16x32xbf16>
    %cst_41 = arith.constant dense<0.000000e+00> : vector<16x32xf32>
    %88 = tpu.matmul %87, %22, %cst_41 {dimension_numbers = #tpu.dot_dimension_numbers<[1], [0], [0], [1], [0, 0, 1, 1], [], []>} : vector<16x32xbf16>, vector<32x32xbf16>, vector<16x32xf32> -> vector<16x32xf32>
    %89 = vector.broadcast %23 : vector<1x32xf32> to vector<16x32xf32>
    %90 = arith.addf %88, %89 : vector<16x32xf32>
    %91 = math.tanh %90 : vector<16x32xf32>
    %92 = arith.truncf %91 : vector<16x32xf32> to vector<16x32xbf16>
    %cst_42 = arith.constant dense<0.000000e+00> : vector<16x32xf32>
    %93 = tpu.matmul %92, %24, %cst_42 {dimension_numbers = #tpu.dot_dimension_numbers<[1], [0], [0], [1], [0, 0, 1, 1], [], []>} : vector<16x32xbf16>, vector<32x32xbf16>, vector<16x32xf32> -> vector<16x32xf32>
    %94 = vector.broadcast %25 : vector<1x32xf32> to vector<16x32xf32>
    %95 = arith.addf %93, %94 : vector<16x32xf32>
    %96 = math.tanh %95 : vector<16x32xf32>
    %97 = arith.addf %96, %1 : vector<16x32xf32>
    %98 = vector.broadcast %9 : vector<16x1xf32> to vector<16x32xf32>
    %99 = arith.mulf %97, %98 : vector<16x32xf32>
    %100 = vector.broadcast %9 : vector<16x1xf32> to vector<16x32xf32>
    %101 = arith.mulf %99, %100 : vector<16x32xf32>
    %102 = vector.shape_cast %101 : vector<16x32xf32> to vector<2x8x32xf32>
    %cst_43 = arith.constant dense<0.000000e+00> : vector<2x32xf32>
    %103 = vector.multi_reduction <add>, %102, %cst_43 [1] : vector<2x8x32xf32> to vector<2x32xf32>
    %cst_44 = arith.constant 1.250000e-01 : f32
    %104 = vector.broadcast %cst_44 : f32 to vector<2x32xf32>
    %105 = arith.mulf %103, %104 : vector<2x32xf32>
    %cst_45 = arith.constant 0.000000e+00 : f32
    %106 = vector.broadcast %cst_45 : f32 to vector<2x32xf32>
    %107 = arith.maximumf %105, %106 : vector<2x32xf32>
    %c0_46 = arith.constant 0 : index
    %c0_47 = arith.constant 0 : index
    %108 = vector.load %arg18[%c0_46, %c0_47] : memref<1x32xf32, #tpu.memory_space<vmem>>, vector<1x32xf32>
    %109 = vector.broadcast %108 : vector<1x32xf32> to vector<2x32xf32>
    %110 = arith.mulf %107, %109 : vector<2x32xf32>
    %cst_48 = arith.constant dense<0.000000e+00> : vector<2xf32>
    %111 = vector.multi_reduction <add>, %110, %cst_48 [1] : vector<2x32xf32> to vector<2xf32>
    %112 = vector.shape_cast %111 : vector<2xf32> to vector<2x1xf32>
    %c0_49 = arith.constant 0 : index
    %c0_50 = arith.constant 0 : index
    %113 = vector.load %arg19[%c0_49, %c0_50] : memref<1x1xf32, #tpu.memory_space<vmem>>, vector<1x1xf32>
    %114 = vector.broadcast %113 : vector<1x1xf32> to vector<2x1xf32>
    %115 = arith.addf %112, %114 : vector<2x1xf32>
    %116 = vector.shape_cast %115 : vector<2x1xf32> to vector<2x1x1xf32>
    %c0_51 = arith.constant 0 : index
    %c0_52 = arith.constant 0 : index
    %c0_53 = arith.constant 0 : index
    %117 = vector.load %arg20[%c0_51, %c0_52, %c0_53] : memref<2x1x1xf32, #tpu.memory_space<vmem>>, vector<2x1x1xf32>
    tpu.vector_store %arg20[%c0_51, %c0_52, %c0_53], %116 {strides = array<i32>} : memref<2x1x1xf32, #tpu.memory_space<vmem>>, vector<2x1x1xf32>,
    return
  }
  func.func @transform_0(%arg0: i32) -> (i32, i32, i32) {
    %c0_i32 = arith.constant 0 : i32
    %c0_i32_0 = arith.constant 0 : i32
    %c0_i32_1 = arith.constant 0 : i32
    return %arg0, %c0_i32, %c0_i32_0 : i32, i32, i32
  }
  func.func @transform_1(%arg0: i32) -> (i32, i32, i32) {
    %c0_i32 = arith.constant 0 : i32
    %c0_i32_0 = arith.constant 0 : i32
    %c0_i32_1 = arith.constant 0 : i32
    return %arg0, %c0_i32, %c0_i32_0 : i32, i32, i32
  }
  func.func @transform_2(%arg0: i32) -> (i32, i32, i32) {
    %c0_i32 = arith.constant 0 : i32
    %c0_i32_0 = arith.constant 0 : i32
    %c0_i32_1 = arith.constant 0 : i32
    return %arg0, %c0_i32, %c0_i32_0 : i32, i32, i32
  }
  func.func @transform_3(%arg0: i32) -> (i32, i32, i32) {
    %c0_i32 = arith.constant 0 : i32
    %c0_i32_0 = arith.constant 0 : i32
    %c0_i32_1 = arith.constant 0 : i32
    return %arg0, %c0_i32, %c0_i32_0 : i32, i32, i32
  }
  func.func @transform_4(%arg0: i32) -> (i32, i32) {
    %c0_i32 = arith.constant 0 : i32
    %c0_i32_0 = arith.constant 0 : i32
    %c0_i32_1 = arith.constant 0 : i32
    return %c0_i32, %c0_i32_0 : i32, i32
  }
  func.func @transform_5(%arg0: i32) -> (i32, i32) {
    %c0_i32 = arith.constant 0 : i32
    %c0_i32_0 = arith.constant 0 : i32
    %c0_i32_1 = arith.constant 0 : i32
    return %c0_i32, %c0_i32_0 : i32, i32
  }
  func.func @transform_6(%arg0: i32) -> (i32, i32) {
    %c0_i32 = arith.constant 0 : i32
    %c0_i32_0 = arith.constant 0 : i32
    %c0_i32_1 = arith.constant 0 : i32
    return %c0_i32, %c0_i32_0 : i32, i32
  }
  func.func @transform_7(%arg0: i32) -> (i32, i32) {
    %c0_i32 = arith.constant 0 : i32
    %c0_i32_0 = arith.constant 0 : i32
    %c0_i32_1 = arith.constant 0 : i32
    return %c0_i32, %c0_i32_0 : i32, i32
  }
  func.func @transform_8(%arg0: i32) -> (i32, i32) {
    %c0_i32 = arith.constant 0 : i32
    %c0_i32_0 = arith.constant 0 : i32
    %c0_i32_1 = arith.constant 0 : i32
    return %c0_i32, %c0_i32_0 : i32, i32
  }
  func.func @transform_9(%arg0: i32) -> (i32, i32) {
    %c0_i32 = arith.constant 0 : i32
    %c0_i32_0 = arith.constant 0 : i32
    %c0_i32_1 = arith.constant 0 : i32
    return %c0_i32, %c0_i32_0 : i32, i32
  }
  func.func @transform_10(%arg0: i32) -> (i32, i32) {
    %c0_i32 = arith.constant 0 : i32
    %c0_i32_0 = arith.constant 0 : i32
    %c0_i32_1 = arith.constant 0 : i32
    return %c0_i32, %c0_i32_0 : i32, i32
  }
  func.func @transform_11(%arg0: i32) -> (i32, i32) {
    %c0_i32 = arith.constant 0 : i32
    %c0_i32_0 = arith.constant 0 : i32
    %c0_i32_1 = arith.constant 0 : i32
    return %c0_i32, %c0_i32_0 : i32, i32
  }
  func.func @transform_12(%arg0: i32) -> (i32, i32) {
    %c0_i32 = arith.constant 0 : i32
    %c0_i32_0 = arith.constant 0 : i32
    %c0_i32_1 = arith.constant 0 : i32
    return %c0_i32, %c0_i32_0 : i32, i32
  }
  func.func @transform_13(%arg0: i32) -> (i32, i32) {
    %c0_i32 = arith.constant 0 : i32
    %c0_i32_0 = arith.constant 0 : i32
    %c0_i32_1 = arith.constant 0 : i32
    return %c0_i32, %c0_i32_0 : i32, i32
  }
  func.func @transform_14(%arg0: i32) -> (i32, i32) {
    %c0_i32 = arith.constant 0 : i32
    %c0_i32_0 = arith.constant 0 : i32
    %c0_i32_1 = arith.constant 0 : i32
    return %c0_i32, %c0_i32_0 : i32, i32
  }
  func.func @transform_15(%arg0: i32) -> (i32, i32) {
    %c0_i32 = arith.constant 0 : i32
    %c0_i32_0 = arith.constant 0 : i32
    %c0_i32_1 = arith.constant 0 : i32
    return %c0_i32, %c0_i32_0 : i32, i32
  }
  func.func @transform_16(%arg0: i32) -> (i32, i32) {
    %c0_i32 = arith.constant 0 : i32
    %c0_i32_0 = arith.constant 0 : i32
    %c0_i32_1 = arith.constant 0 : i32
    return %c0_i32, %c0_i32_0 : i32, i32
  }
  func.func @transform_17(%arg0: i32) -> (i32, i32) {
    %c0_i32 = arith.constant 0 : i32
    %c0_i32_0 = arith.constant 0 : i32
    %c0_i32_1 = arith.constant 0 : i32
    return %c0_i32, %c0_i32_0 : i32, i32
  }
  func.func @transform_18(%arg0: i32) -> (i32, i32) {
    %c0_i32 = arith.constant 0 : i32
    %c0_i32_0 = arith.constant 0 : i32
    %c0_i32_1 = arith.constant 0 : i32
    return %c0_i32, %c0_i32_0 : i32, i32
  }
  func.func @transform_19(%arg0: i32) -> (i32, i32, i32) {
    %c0_i32 = arith.constant 0 : i32
    %c0_i32_0 = arith.constant 0 : i32
    %c0_i32_1 = arith.constant 0 : i32
    return %arg0, %c0_i32, %c0_i32_0 : i32, i32, i32
  }
}

</mosaic_0001>

<llo_original>
// kernel: tpu_custom_call.1
$region0: #{tpu_custom_call.1}
  #allocation0 [shape = 'u32[]', space=smem, size = 0x4, offset = 0x4, fixed_abs, tag = 'smem constant byte address 0x4 - core index']
  #allocation1 [shape = 'u32[144,128]{1,0:T(1,128)}', space=vmem, size = 0x12000, scoped, tag = 'internal scratch']
  #allocation2 [shape = 'f32[1,1]{1,0:T(1,128)S(1)}', space=vmem, size = 0x200, scoped, tag = 'scoped memory for tpu_custom_call.1']
  #allocation3 [shape = 'f32[1,1]{1,0:T(1,128)S(1)}', space=vmem, size = 0x200, scoped, tag = 'scoped memory for tpu_custom_call.1']
  %s0 = inlined_call_operand.vmem [shape: f32[2,8,32], index: 0, kind: input, shape index: {}]
  %s1 = inlined_call_operand.hbm [shape: f32[2,8,8], index: 1, kind: input, shape index: {}]
  %s2 = inlined_call_operand.hbm [shape: f32[2,1,8], index: 2, kind: input, shape index: {}]
  %s3 = inlined_call_operand.vmem [shape: f32[2,8,1], index: 3, kind: input, shape index: {}]
  %s4 = inlined_call_operand.vmem [shape: bf16[32,64], index: 4, kind: input, shape index: {}]
  %s5 = inlined_call_operand.hbm [shape: f32[1,32], index: 5, kind: input, shape index: {}]
  %s6 = inlined_call_operand.hbm [shape: f32[1,32], index: 6, kind: input, shape index: {}]
  %s7 = inlined_call_operand.vmem [shape: bf16[32,32], index: 7, kind: input, shape index: {}]
  %s8 = inlined_call_operand.vmem [shape: f32[1,32], index: 8, kind: input, shape index: {}]
  %s9 = inlined_call_operand.hbm [shape: bf16[32,33], index: 9, kind: input, shape index: {}]
  %s10 = inlined_call_operand.vmem [shape: f32[1,33], index: 10, kind: input, shape index: {}]
  %s11 = inlined_call_operand.vmem [shape: f32[1,32], index: 11, kind: input, shape index: {}]
  %s12 = inlined_call_operand.<no memory space> [shape: f32[1,1], index: 12, kind: input, shape index: {}]
  %s13 = inlined_call_operand.vmem [shape: bf16[32,32], index: 13, kind: input, shape index: {}]
  %s14 = inlined_call_operand.vmem [shape: f32[1,32], index: 14, kind: input, shape index: {}]
  %s15 = inlined_call_operand.hbm [shape: bf16[32,32], index: 15, kind: input, shape index: {}]
  %s16 = inlined_call_operand.vmem [shape: f32[1,32], index: 16, kind: input, shape index: {}]
  %s17 = inlined_call_operand.vmem [shape: f32[1,32], index: 17, kind: input, shape index: {}]
  %s18 = inlined_call_operand.<no memory space> [shape: f32[1,1], index: 18, kind: input, shape index: {}]
  %s19 = inlined_call_operand.vmem [shape: f32[2,1,1], index: 19, kind: output, shape index: {}]
  %s20 = sld [smem:[#allocation0]]
  $region110: #{tpu_custom_call.1} parent=0
    _
  %s22 = ssub.s32 1, %s20
  %s23 = scalar_select 0, %s22, %s20
  %v24 = vstv %s12
  %25 = vst [vmem:[#allocation2] sm:$0x1] %v24
  %v26 = vstv %s18
  %27 = vst [vmem:[#allocation3] sm:$0x1] %v26
  $region1: #{tpu_custom_call.1} parent=0
    #allocation4 [shape = 'u8[8192]{0}', space=vmem, size = 0x2000, scoped, tag = 'input window, operand 1, single buffered']
    #allocation5 [shape = 's32[1]{0}', space=sflag, size = 0x4, scoped, tag = 'scoped memory for tpu_custom_call.1']
    #allocation6 [shape = 'u8[1024]{0}', space=vmem, size = 0x400, scoped, tag = 'input window, operand 2, single buffered']
    #allocation7 [shape = 's32[1]{0}', space=sflag, size = 0x4, scoped, tag = 'scoped memory for tpu_custom_call.1']
    #allocation8 [shape = 'u8[512]{0}', space=vmem, size = 0x400, scoped, tag = 'input window, operand 5, single buffered']
    #allocation9 [shape = 'u8[512]{0}', space=vmem, size = 0x400, scoped, tag = 'input window, operand 6, single buffered']
    #allocation10 [shape = 's32[1]{0}', space=sflag, size = 0x4, scoped, tag = 'scoped memory for tpu_custom_call.1']
    #allocation11 [shape = 'u8[8192]{0}', space=vmem, size = 0x2000, scoped, tag = 'input window, operand 9, single buffered']
    #allocation12 [shape = 'u8[8192]{0}', space=vmem, size = 0x2000, scoped, tag = 'input window, operand 15, single buffered']
    #allocation13 [shape = 's32[1]{0}', space=sflag, size = 0x4, scoped, tag = 'scoped memory for tpu_custom_call.1']
    %28 = vsyncpa [#allocation5], 0
    %29 = vsyncpa [#allocation7], 0
    %30 = vsyncpa [#allocation10], 0
    %31 = vsyncpa [#allocation13], 0
    // Predicated region
    $region2: #{tpu_custom_call.1} parent=1 // pred_check
      _
    $region3: #{tpu_custom_call.1} parent=1 // pred_check_branch
      %33 = sbr.rel (0) target = $region5
    $region4: #{tpu_custom_call.1} parent=1 // pred_region
      _
    $region5: #{tpu_custom_call.1} parent=1 // pred_fallthru
      _
    // Predicated region
    $region6: #{tpu_custom_call.1} parent=1 // pred_check
      _
    $region7: #{tpu_custom_call.1} parent=1 // pred_check_branch
      %35 = sbr.rel (0) target = $region9
    $region8: #{tpu_custom_call.1} parent=1 // pred_region
      %s37 = ssub.s32 256, 256
      %38 = vsyncadd [#allocation5], %s37
      %s39 = sshll.u32 [#allocation4], 4
      %s40 = int_to_ptr.vmem [resolvable:$true] %s39
      %45 = dma.hbm_to_vmem [thread:$0]  %s1, 256, %s40, [#allocation5], 128, 128, 8
    $region9: #{tpu_custom_call.1} parent=1 // pred_fallthru
      _
    // Predicated region
    $region10: #{tpu_custom_call.1} parent=1 // pred_check
      _
    $region11: #{tpu_custom_call.1} parent=1 // pred_check_branch
      %47 = sbr.rel (0) target = $region13
    $region12: #{tpu_custom_call.1} parent=1 // pred_region
      %s49 = ssub.s32 32, 32
      %50 = vsyncadd [#allocation7], %s49
      %s51 = sshll.u32 [#allocation6], 4
      %s52 = int_to_ptr.vmem [resolvable:$true] %s51
      %57 = dma.hbm_to_vmem [thread:$0]  %s2, 32, %s52, [#allocation7], 16, 16, 1
    $region13: #{tpu_custom_call.1} parent=1 // pred_fallthru
      _
    // Predicated region
    $region14: #{tpu_custom_call.1} parent=1 // pred_check
      _
    $region15: #{tpu_custom_call.1} parent=1 // pred_check_branch
      %59 = sbr.rel (0) target = $region17
    $region16: #{tpu_custom_call.1} parent=1 // pred_region
      _
    $region17: #{tpu_custom_call.1} parent=1 // pred_fallthru
      _
    // Predicated region
    $region18: #{tpu_custom_call.1} parent=1 // pred_check
      _
    $region19: #{tpu_custom_call.1} parent=1 // pred_check_branch
      %61 = sbr.rel (0) target = $region21
    $region20: #{tpu_custom_call.1} parent=1 // pred_region
      _
    $region21: #{tpu_custom_call.1} parent=1 // pred_fallthru
      _
    // Predicated region
    $region22: #{tpu_custom_call.1} parent=1 // pred_check
      _
    $region23: #{tpu_custom_call.1} parent=1 // pred_check_branch
      %63 = sbr.rel (0) target = $region25
    $region24: #{tpu_custom_call.1} parent=1 // pred_region
      %s65 = ssub.s32 16, 16
      %66 = vsyncadd [#allocation7], %s65
      %s68 = sshll.u32 [#allocation8], 4
      %s69 = int_to_ptr.vmem [resolvable:$true] %s68
      %71 = dma.hbm_to_vmem [thread:$0]  %s5, 16, %s69, [#allocation7]
    $region25: #{tpu_custom_call.1} parent=1 // pred_fallthru
      _
    // Predicated region
    $region26: #{tpu_custom_call.1} parent=1 // pred_check
      _
    $region27: #{tpu_custom_call.1} parent=1 // pred_check_branch
      %73 = sbr.rel (0) target = $region29
    $region28: #{tpu_custom_call.1} parent=1 // pred_region
      %s75 = ssub.s32 16, 16
      %76 = vsyncadd [#allocation10], %s75
      %s78 = sshll.u32 [#allocation9], 4
      %s79 = int_to_ptr.vmem [resolvable:$true] %s78
      %81 = dma.hbm_to_vmem [thread:$0]  %s6, 16, %s79, [#allocation10]
    $region29: #{tpu_custom_call.1} parent=1 // pred_fallthru
      _
    // Predicated region
    $region30: #{tpu_custom_call.1} parent=1 // pred_check
      _
    $region31: #{tpu_custom_call.1} parent=1 // pred_check_branch
      %83 = sbr.rel (0) target = $region33
    $region32: #{tpu_custom_call.1} parent=1 // pred_region
      _
    $region33: #{tpu_custom_call.1} parent=1 // pred_fallthru
      _
    // Predicated region
    $region34: #{tpu_custom_call.1} parent=1 // pred_check
      _
    $region35: #{tpu_custom_call.1} parent=1 // pred_check_branch
      %85 = sbr.rel (0) target = $region37
    $region36: #{tpu_custom_call.1} parent=1 // pred_region
      _
    $region37: #{tpu_custom_call.1} parent=1 // pred_fallthru
      _
    // Predicated region
    $region38: #{tpu_custom_call.1} parent=1 // pred_check
      _
    $region39: #{tpu_custom_call.1} parent=1 // pred_check_branch
      %87 = sbr.rel (0) target = $region41
    $region40: #{tpu_custom_call.1} parent=1 // pred_region
      %s89 = ssub.s32 256, 256
      %90 = vsyncadd [#allocation10], %s89
      %s91 = sshll.u32 [#allocation11], 4
      %s92 = int_to_ptr.vmem [resolvable:$true] %s91
      %97 = dma.hbm_to_vmem [thread:$0]  %s9, 256, %s92, [#allocation10], 64, 64, 4
    $region41: #{tpu_custom_call.1} parent=1 // pred_fallthru
      _
    // Predicated region
    $region42: #{tpu_custom_call.1} parent=1 // pred_check
      _
    $region43: #{tpu_custom_call.1} parent=1 // pred_check_branch
      %99 = sbr.rel (0) target = $region45
    $region44: #{tpu_custom_call.1} parent=1 // pred_region
      _
    $region45: #{tpu_custom_call.1} parent=1 // pred_fallthru
      _
    // Predicated region
    $region46: #{tpu_custom_call.1} parent=1 // pred_check
      _
    $region47: #{tpu_custom_call.1} parent=1 // pred_check_branch
      %101 = sbr.rel (0) target = $region49
    $region48: #{tpu_custom_call.1} parent=1 // pred_region
      _
    $region49: #{tpu_custom_call.1} parent=1 // pred_fallthru
      _
    // Predicated region
    $region50: #{tpu_custom_call.1} parent=1 // pred_check
      _
    $region51: #{tpu_custom_call.1} parent=1 // pred_check_branch
      %103 = sbr.rel (0) target = $region53
    $region52: #{tpu_custom_call.1} parent=1 // pred_region
      _
    $region53: #{tpu_custom_call.1} parent=1 // pred_fallthru
      _
    // Predicated region
    $region54: #{tpu_custom_call.1} parent=1 // pred_check
      _
    $region55: #{tpu_custom_call.1} parent=1 // pred_check_branch
      %105 = sbr.rel (0) target = $region57
    $region56: #{tpu_custom_call.1} parent=1 // pred_region
      _
    $region57: #{tpu_custom_call.1} parent=1 // pred_fallthru
      _
    // Predicated region
    $region58: #{tpu_custom_call.1} parent=1 // pred_check
      _
    $region59: #{tpu_custom_call.1} parent=1 // pred_check_branch
      %107 = sbr.rel (0) target = $region61
    $region60: #{tpu_custom_call.1} parent=1 // pred_region
      _
    $region61: #{tpu_custom_call.1} parent=1 // pred_fallthru
      _
    // Predicated region
    $region62: #{tpu_custom_call.1} parent=1 // pred_check
      _
    $region63: #{tpu_custom_call.1} parent=1 // pred_check_branch
      %109 = sbr.rel (0) target = $region65
    $region64: #{tpu_custom_call.1} parent=1 // pred_region
      %s111 = ssub.s32 256, 256
      %112 = vsyncadd [#allocation13], %s111
      %s113 = sshll.u32 [#allocation12], 4
      %s114 = int_to_ptr.vmem [resolvable:$true] %s113
      %119 = dma.hbm_to_vmem [thread:$0]  %s15, 256, %s114, [#allocation13], 64, 64, 4
    $region65: #{tpu_custom_call.1} parent=1 // pred_fallthru
      _
    // Predicated region
    $region66: #{tpu_custom_call.1} parent=1 // pred_check
      _
    $region67: #{tpu_custom_call.1} parent=1 // pred_check_branch
      %121 = sbr.rel (0) target = $region69
    $region68: #{tpu_custom_call.1} parent=1 // pred_region
      _
    $region69: #{tpu_custom_call.1} parent=1 // pred_fallthru
      _
    // Predicated region
    $region70: #{tpu_custom_call.1} parent=1 // pred_check
      _
    $region71: #{tpu_custom_call.1} parent=1 // pred_check_branch
      %123 = sbr.rel (0) target = $region73
    $region72: #{tpu_custom_call.1} parent=1 // pred_region
      _
    $region73: #{tpu_custom_call.1} parent=1 // pred_fallthru
      _
    // Predicated region
    $region74: #{tpu_custom_call.1} parent=1 // pred_check
      _
    $region75: #{tpu_custom_call.1} parent=1 // pred_check_branch
      %125 = sbr.rel (0) target = $region77
    $region76: #{tpu_custom_call.1} parent=1 // pred_region
      _
    $region77: #{tpu_custom_call.1} parent=1 // pred_fallthru
      _
    // Predicated region
    $region78: #{tpu_custom_call.1} parent=1 // pred_check
      _
    $region79: #{tpu_custom_call.1} parent=1 // pred_check_branch
      %127 = sbr.rel (0) target = $region81
    $region80: #{tpu_custom_call.1} parent=1 // pred_region
      %128 = dma.done [#allocation5], 256
    $region81: #{tpu_custom_call.1} parent=1 // pred_fallthru
      _
    // Predicated region
    $region82: #{tpu_custom_call.1} parent=1 // pred_check
      _
    $region83: #{tpu_custom_call.1} parent=1 // pred_check_branch
      %130 = sbr.rel (0) target = $region85
    $region84: #{tpu_custom_call.1} parent=1 // pred_region
      %131 = dma.done [#allocation7], 32
    $region85: #{tpu_custom_call.1} parent=1 // pred_fallthru
      _
    // Predicated region
    $region86: #{tpu_custom_call.1} parent=1 // pred_check
      _
    $region87: #{tpu_custom_call.1} parent=1 // pred_check_branch
      %133 = sbr.rel (0) target = $region89
    $region88: #{tpu_custom_call.1} parent=1 // pred_region
      %134 = dma.done [#allocation7], 16
    $region89: #{tpu_custom_call.1} parent=1 // pred_fallthru
      _
    // Predicated region
    $region90: #{tpu_custom_call.1} parent=1 // pred_check
      _
    $region91: #{tpu_custom_call.1} parent=1 // pred_check_branch
      %136 = sbr.rel (0) target = $region93
    $region92: #{tpu_custom_call.1} parent=1 // pred_region
      %137 = dma.done [#allocation10], 16
    $region93: #{tpu_custom_call.1} parent=1 // pred_fallthru
      _
    // Predicated region
    $region94: #{tpu_custom_call.1} parent=1 // pred_check
      _
    $region95: #{tpu_custom_call.1} parent=1 // pred_check_branch
      %139 = sbr.rel (0) target = $region97
    $region96: #{tpu_custom_call.1} parent=1 // pred_region
      %140 = dma.done [#allocation10], 256
    $region97: #{tpu_custom_call.1} parent=1 // pred_fallthru
      _
    // Predicated region
    $region98: #{tpu_custom_call.1} parent=1 // pred_check
      _
    $region99: #{tpu_custom_call.1} parent=1 // pred_check_branch
      %142 = sbr.rel (0) target = $region101
    $region100: #{tpu_custom_call.1} parent=1 // pred_region
      %143 = dma.done [#allocation13], 256
    $region101: #{tpu_custom_call.1} parent=1 // pred_fallthru
      _
    %v145 = vld [vmem:[%s0] sm:$0xff]
    %v146 = vld [vmem:[%s0 + $0x8] sm:$0xff]
    %v147 = vld [vmem:[#allocation4] sm:$0xff]
    %v148 = vld [vmem:[#allocation4 + $0x8] sm:$0xff]
    %v149 = vld [vmem:[#allocation6] sm:$0x1]
    %v150 = vld [vmem:[#allocation6 + $0x1] sm:$0x1]
    %v151 = vld [vmem:[%s3] sm:$0xff]
    %v152 = vld [vmem:[%s3 + $0x8] sm:$0xff]
    %154 = vset.pattern.permute.xlu0 0
    %155 = vperm.xlu0 %154, %v151
    %v156 = vpop.permute.xlu0 %155
    %159 = vset.pattern.permute.xlu0 0
    %160 = vperm.xlu0 %159, %v152
    %v161 = vpop.permute.xlu0 %160
    %v165 = vlaneseq
    %v166 = vshrl.u32 %v165, 7
    %v167 = vsub.s32 0, %v166
    %v168 = vrot.slane %v149, %v167
    %v169 = vlaneseq
    %v170 = vshrl.u32 %v169, 7
    %v171 = vsub.s32 0, %v170
    %v172 = vrot.slane %v150, %v171
    %v175 = vmul.f32 %v156, %v168
    %v176 = vmul.f32 %v161, %v172
    %v177 = vlaneseq
    %v178 = vshrl.u32 %v177, 7
    %v179 = vsub.s32 0, %v178
    %v180 = vrot.slane %v175, %v179
    %182 = vbcast.lane.b32.xlu0 %v180, 256
    %v183 = vpop.permute.xlu0 %182
    %v184 = vlaneseq
    %v185 = vshrl.u32 %v184, 7
    %v186 = vsub.s32 1, %v185
    %v187 = vrot.slane %v175, %v186
    %189 = vbcast.lane.b32.xlu0 %v187, 256
    %v190 = vpop.permute.xlu0 %189
    %v191 = vlaneseq
    %v192 = vshrl.u32 %v191, 7
    %v193 = vsub.s32 2, %v192
    %v194 = vrot.slane %v175, %v193
    %196 = vbcast.lane.b32.xlu0 %v194, 256
    %v197 = vpop.permute.xlu0 %196
    %v198 = vlaneseq
    %v199 = vshrl.u32 %v198, 7
    %v200 = vsub.s32 3, %v199
    %v201 = vrot.slane %v175, %v200
    %203 = vbcast.lane.b32.xlu0 %v201, 256
    %v204 = vpop.permute.xlu0 %203
    %v205 = vlaneseq
    %v206 = vshrl.u32 %v205, 7
    %v207 = vsub.s32 4, %v206
    %v208 = vrot.slane %v175, %v207
    %210 = vbcast.lane.b32.xlu0 %v208, 256
    %v211 = vpop.permute.xlu0 %210
    %v212 = vlaneseq
    %v213 = vshrl.u32 %v212, 7
    %v214 = vsub.s32 5, %v213
    %v215 = vrot.slane %v175, %v214
    %217 = vbcast.lane.b32.xlu0 %v215, 256
    %v218 = vpop.permute.xlu0 %217
    %v219 = vlaneseq
    %v220 = vshrl.u32 %v219, 7
    %v221 = vsub.s32 6, %v220
    %v222 = vrot.slane %v175, %v221
    %224 = vbcast.lane.b32.xlu0 %v222, 256
    %v225 = vpop.permute.xlu0 %224
    %v226 = vlaneseq
    %v227 = vshrl.u32 %v226, 7
    %v228 = vsub.s32 7, %v227
    %v229 = vrot.slane %v175, %v228
    %231 = vbcast.lane.b32.xlu0 %v229, 256
    %v232 = vpop.permute.xlu0 %231
    %v233 = vlaneseq
    %v234 = vshrl.u32 %v233, 7
    %v235 = vsub.s32 0, %v234
    %v236 = vrot.slane %v176, %v235
    %238 = vbcast.lane.b32.xlu0 %v236, 256
    %v239 = vpop.permute.xlu0 %238
    %v240 = vlaneseq
    %v241 = vshrl.u32 %v240, 7
    %v242 = vsub.s32 1, %v241
    %v243 = vrot.slane %v176, %v242
    %245 = vbcast.lane.b32.xlu0 %v243, 256
    %v246 = vpop.permute.xlu0 %245
    %v247 = vlaneseq
    %v248 = vshrl.u32 %v247, 7
    %v249 = vsub.s32 2, %v248
    %v250 = vrot.slane %v176, %v249
    %252 = vbcast.lane.b32.xlu0 %v250, 256
    %v253 = vpop.permute.xlu0 %252
    %v254 = vlaneseq
    %v255 = vshrl.u32 %v254, 7
    %v256 = vsub.s32 3, %v255
    %v257 = vrot.slane %v176, %v256
    %259 = vbcast.lane.b32.xlu0 %v257, 256
    %v260 = vpop.permute.xlu0 %259
    %v261 = vlaneseq
    %v262 = vshrl.u32 %v261, 7
    %v263 = vsub.s32 4, %v262
    %v264 = vrot.slane %v176, %v263
    %266 = vbcast.lane.b32.xlu0 %v264, 256
    %v267 = vpop.permute.xlu0 %266
    %v268 = vlaneseq
    %v269 = vshrl.u32 %v268, 7
    %v270 = vsub.s32 5, %v269
    %v271 = vrot.slane %v176, %v270
    %273 = vbcast.lane.b32.xlu0 %v271, 256
    %v274 = vpop.permute.xlu0 %273
    %v275 = vlaneseq
    %v276 = vshrl.u32 %v275, 7
    %v277 = vsub.s32 6, %v276
    %v278 = vrot.slane %v176, %v277
    %280 = vbcast.lane.b32.xlu0 %v278, 256
    %v281 = vpop.permute.xlu0 %280
    %v282 = vlaneseq
    %v283 = vshrl.u32 %v282, 7
    %v284 = vsub.s32 7, %v283
    %v285 = vrot.slane %v176, %v284
    %287 = vbcast.lane.b32.xlu0 %v285, 256
    %v288 = vpop.permute.xlu0 %287
    %v289 = vlaneseq
    %v290 = vshrl.u32 %v289, 7
    %v291 = vlaneseq
    %v292 = vand.u32 %v291, 127
    %vm293 = vcmp.eq.s32.totalorder %v290, %v292
    %v294 = vsel %vm293, 1, 0
    %v295 = vcvt.s32.f32 %v294
    %v296 = vld [vmem:[%s4] sm:$0xf]
    %v297 = vld [vmem:[%s4 + $0x4] sm:$0xf]
    %v298 = vld [vmem:[%s4 + $0x8] sm:$0xf]
    %v299 = vld [vmem:[%s4 + $0xc] sm:$0xf]
    %v300 = vld [vmem:[#allocation8] sm:$0x1]
    %v301 = vld [vmem:[#allocation9] sm:$0x1]
    %v302 = vld [vmem:[%s7] sm:$0xf]
    %v303 = vld [vmem:[%s7 + $0x4] sm:$0xf]
    %v304 = vld [vmem:[%s7 + $0x8] sm:$0xf]
    %v305 = vld [vmem:[%s7 + $0xc] sm:$0xf]
    %v306 = vld [vmem:[%s8] sm:$0x1]
    %v307 = vld [vmem:[#allocation11] sm:$0xf]
    %v308 = vld [vmem:[#allocation11 + $0x4] sm:$0xf]
    %v309 = vld [vmem:[#allocation11 + $0x8] sm:$0xf]
    %v310 = vld [vmem:[#allocation11 + $0xc] sm:$0xf]
    %v311 = vld [vmem:[%s10] sm:$0x1]
    %v312 = vld [vmem:[%s13] sm:$0xf]
    %v313 = vld [vmem:[%s13 + $0x4] sm:$0xf]
    %v314 = vld [vmem:[%s13 + $0x8] sm:$0xf]
    %v315 = vld [vmem:[%s13 + $0xc] sm:$0xf]
    %v316 = vld [vmem:[%s14] sm:$0x1]
    %v317 = vld [vmem:[#allocation12] sm:$0xf]
    %v318 = vld [vmem:[#allocation12 + $0x4] sm:$0xf]
    %v319 = vld [vmem:[#allocation12 + $0x8] sm:$0xf]
    %v320 = vld [vmem:[#allocation12 + $0xc] sm:$0xf]
    %v321 = vld [vmem:[%s16] sm:$0x1]
    %vm322 = vcmask 64512
    %v324 = vsel %vm322, %v147, 0
    %326 = vmatprep.subr.mxu0 0.0
    %327 = vmatpush1.xpose.msra.mxu0 %v324
    %328 = vmatprep.subr.mxu0 0.0
    %329 = vmatpush1.xpose.msra.mxu0 0.0
    %330 = vmatprep.subr.mxu0 0.0
    %331 = vmatpush1.xpose.msra.mxu0 0.0
    %332 = vmatprep.subr.mxu0 0.0
    %333 = vmatpush1.xpose.msra.mxu0 0.0
    %334 = vmatprep.subr.mxu0 0.0
    %335 = vmatpush1.xpose.msra.mxu0 0.0
    %336 = vmatprep.subr.mxu0 0.0
    %337 = vmatpush1.xpose.msra.mxu0 0.0
    %338 = vmatprep.subr.mxu0 0.0
    %339 = vmatpush1.xpose.msra.mxu0 0.0
    %340 = vmatprep.subr.mxu0 0.0
    %341 = vmatpush1.xpose.msra.mxu0 0.0
    %342 = vmatprep.subr.mxu0 0.0
    %343 = vmatpush1.xpose.msra.mxu0 0.0
    %344 = vmatprep.subr.mxu0 0.0
    %345 = vmatpush1.xpose.msra.mxu0 0.0
    %346 = vmatprep.subr.mxu0 0.0
    %347 = vmatpush1.xpose.msra.mxu0 0.0
    %348 = vmatprep.subr.mxu0 0.0
    %349 = vmatpush1.xpose.msra.mxu0 0.0
    %350 = vmatprep.subr.mxu0 0.0
    %351 = vmatpush1.xpose.msra.mxu0 0.0
    %352 = vmatprep.subr.mxu0 0.0
    %353 = vmatpush1.xpose.msra.mxu0 0.0
    %354 = vmatprep.subr.mxu0 0.0
    %355 = vmatpush1.xpose.msra.mxu0 0.0
    %356 = vmatprep.subr.mxu0 0.0
    %357 = vmatpush1.xpose.msra.mxu0 0.0
    %358 = vmatprep.subr.mxu0 0.0
    %359 = vmatpush1.xpose.msra.mxu0 0.0
    %360 = vmatprep.subr.mxu0 0.0
    %361 = vmatpush1.xpose.msra.mxu0 0.0
    %362 = vmatprep.subr.mxu0 0.0
    %363 = vmatpush1.xpose.msra.mxu0 0.0
    %364 = vmatprep.subr.mxu0 0.0
    %365 = vmatpush1.xpose.msra.mxu0 0.0
    %366 = vmatprep.subr.mxu0 0.0
    %367 = vmatpush1.xpose.msra.mxu0 0.0
    %368 = vmatprep.subr.mxu0 0.0
    %369 = vmatpush1.xpose.msra.mxu0 0.0
    %370 = vmatprep.subr.mxu0 0.0
    %371 = vmatpush1.xpose.msra.mxu0 0.0
    %372 = vmatprep.subr.mxu0 0.0
    %373 = vmatpush1.xpose.msra.mxu0 0.0
    %374 = vmatprep.subr.mxu0 0.0
    %375 = vmatpush1.xpose.msra.mxu0 0.0
    %376 = vmatprep.subr.mxu0 0.0
    %377 = vmatpush1.xpose.msra.mxu0 0.0
    %378 = vmatprep.subr.mxu0 0.0
    %379 = vmatpush1.xpose.msra.mxu0 0.0
    %380 = vmatprep.subr.mxu0 0.0
    %381 = vmatpush1.xpose.msra.mxu0 0.0
    %382 = vmatprep.subr.mxu0 0.0
    %383 = vmatpush1.xpose.msra.mxu0 0.0
    %384 = vmatprep.subr.mxu0 0.0
    %385 = vmatpush1.xpose.msra.mxu0 0.0
    %386 = vmatprep.subr.mxu0 0.0
    %387 = vmatpush1.xpose.msra.mxu0 0.0
    %388 = vmatprep.subr.mxu0 0.0
    %389 = vmatpush1.xpose.msra.mxu0 0.0
    %390 = vmatprep.mubr.f32.mxu0 0.0
    %391 = vmatmul.mubr.f32.gmra.mrb[0].mxu0 %v324
    %v392 = vpop.f32.mrb[0].mxu0
    %v393 = vadd.f32 0.0, %v392
    %v394 = vpop.f32.mrb[0].mxu0
    %395 = vdwg.mxu0
    %v397 = vsel %vm322, %v148, 0
    %399 = vmatprep.subr.mxu0 0.0
    %400 = vmatpush1.xpose.msra.mxu0 %v397
    %401 = vmatprep.subr.mxu0 0.0
    %402 = vmatpush1.xpose.msra.mxu0 0.0
    %403 = vmatprep.subr.mxu0 0.0
    %404 = vmatpush1.xpose.msra.mxu0 0.0
    %405 = vmatprep.subr.mxu0 0.0
    %406 = vmatpush1.xpose.msra.mxu0 0.0
    %407 = vmatprep.subr.mxu0 0.0
    %408 = vmatpush1.xpose.msra.mxu0 0.0
    %409 = vmatprep.subr.mxu0 0.0
    %410 = vmatpush1.xpose.msra.mxu0 0.0
    %411 = vmatprep.subr.mxu0 0.0
    %412 = vmatpush1.xpose.msra.mxu0 0.0
    %413 = vmatprep.subr.mxu0 0.0
    %414 = vmatpush1.xpose.msra.mxu0 0.0
    %415 = vmatprep.subr.mxu0 0.0
    %416 = vmatpush1.xpose.msra.mxu0 0.0
    %417 = vmatprep.subr.mxu0 0.0
    %418 = vmatpush1.xpose.msra.mxu0 0.0
    %419 = vmatprep.subr.mxu0 0.0
    %420 = vmatpush1.xpose.msra.mxu0 0.0
    %421 = vmatprep.subr.mxu0 0.0
    %422 = vmatpush1.xpose.msra.mxu0 0.0
    %423 = vmatprep.subr.mxu0 0.0
    %424 = vmatpush1.xpose.msra.mxu0 0.0
    %425 = vmatprep.subr.mxu0 0.0
    %426 = vmatpush1.xpose.msra.mxu0 0.0
    %427 = vmatprep.subr.mxu0 0.0
    %428 = vmatpush1.xpose.msra.mxu0 0.0
    %429 = vmatprep.subr.mxu0 0.0
    %430 = vmatpush1.xpose.msra.mxu0 0.0
    %431 = vmatprep.subr.mxu0 0.0
    %432 = vmatpush1.xpose.msra.mxu0 0.0
    %433 = vmatprep.subr.mxu0 0.0
    %434 = vmatpush1.xpose.msra.mxu0 0.0
    %435 = vmatprep.subr.mxu0 0.0
    %436 = vmatpush1.xpose.msra.mxu0 0.0
    %437 = vmatprep.subr.mxu0 0.0
    %438 = vmatpush1.xpose.msra.mxu0 0.0
    %439 = vmatprep.subr.mxu0 0.0
    %440 = vmatpush1.xpose.msra.mxu0 0.0
    %441 = vmatprep.subr.mxu0 0.0
    %442 = vmatpush1.xpose.msra.mxu0 0.0
    %443 = vmatprep.subr.mxu0 0.0
    %444 = vmatpush1.xpose.msra.mxu0 0.0
    %445 = vmatprep.subr.mxu0 0.0
    %446 = vmatpush1.xpose.msra.mxu0 0.0
    %447 = vmatprep.subr.mxu0 0.0
    %448 = vmatpush1.xpose.msra.mxu0 0.0
    %449 = vmatprep.subr.mxu0 0.0
    %450 = vmatpush1.xpose.msra.mxu0 0.0
    %451 = vmatprep.subr.mxu0 0.0
    %452 = vmatpush1.xpose.msra.mxu0 0.0
    %453 = vmatprep.subr.mxu0 0.0
    %454 = vmatpush1.xpose.msra.mxu0 0.0
    %455 = vmatprep.subr.mxu0 0.0
    %456 = vmatpush1.xpose.msra.mxu0 0.0
    %457 = vmatprep.subr.mxu0 0.0
    %458 = vmatpush1.xpose.msra.mxu0 0.0
    %459 = vmatprep.subr.mxu0 0.0
    %460 = vmatpush1.xpose.msra.mxu0 0.0
    %461 = vmatprep.subr.mxu0 0.0
    %462 = vmatpush1.xpose.msra.mxu0 0.0
    %463 = vmatprep.mubr.f32.mxu0 0.0
    %464 = vmatmul.mubr.f32.gmra.mrb[0].mxu0 %v397
    %v465 = vpop.f32.mrb[0].mxu0
    %v466 = vadd.f32 0.0, %v465
    %v467 = vpop.f32.mrb[0].mxu0
    %468 = vdwg.mxu0
    %v469 = vmul.f32 %v393, %v295
    %v470 = vmul.f32 %v466, %v295
    %v471 = vsel %vm322, %v469, 0.0
    %472 = vadd.xlane.f32.xlu0 %v471
    %v473 = vpop.xlane.xlu0 %472
    %v474 = vsel %vm322, %v470, 0.0
    %475 = vadd.xlane.f32.xlu0 %v474
    %v476 = vpop.xlane.xlu0 %475
    %v477 = vrot.slane %v471, 4
    %v478 = vadd.f32 %v471, %v477
    %v479 = vrot.slane %v478, 2
    %v480 = vadd.f32 %v478, %v479
    %v481 = vrot.slane %v480, 1
    %v482 = vadd.f32 %v480, %v481
    %v483 = vrot.slane %v474, 4
    %v484 = vadd.f32 %v474, %v483
    %v485 = vrot.slane %v484, 2
    %v486 = vadd.f32 %v484, %v485
    %v487 = vrot.slane %v486, 1
    %v488 = vadd.f32 %v486, %v487
    %v489 = vadd.f32 %v473, %v482
    %v490 = vadd.f32 %v476, %v488
    %v491 = vmul.f32 %v393, 2.0
    %v492 = vmul.f32 %v466, 2.0
    %v493 = vsub.f32 %v489, %v491
    %v494 = vsub.f32 %v490, %v492
    %v495 = vmul.f32 %v493, %v175
    %v496 = vmul.f32 %v494, %v176
    %v497 = vpack.c.bf16 %v146, %v145
    %v502 = vunpack.c.l.b16 %v296
    %v503 = vunpack.c.l.b16 %v297
    %v504 = vunpack.c.l.b16 %v298
    %v505 = vunpack.c.l.b16 %v299
    %v506 = vpack.c.b16 %v503, %v502
    %v507 = vpack.c.b16 %v505, %v504
    %vm510 = vcmask 261120
    %v512 = vsel %vm510, %v497, 0
    %514 = vmatprep.subr.bf16.mxu0 0
    %515 = vmatpush1.bf16.msra.mxu0 %v506
    %516 = vmatprep.subr.bf16.mxu0 0
    %517 = vmatpush1.bf16.msra.mxu0 %v507
    %518 = vmatprep.subr.bf16.mxu0 0
    %519 = vmatpush1.bf16.msra.mxu0 0
    %520 = vmatprep.subr.bf16.mxu0 0
    %521 = vmatpush1.bf16.msra.mxu0 0
    %522 = vmatprep.subr.bf16.mxu0 0
    %523 = vmatpush1.bf16.msra.mxu0 0
    %524 = vmatprep.subr.bf16.mxu0 0
    %525 = vmatpush1.bf16.msra.mxu0 0
    %526 = vmatprep.subr.bf16.mxu0 0
    %527 = vmatpush1.bf16.msra.mxu0 0
    %528 = vmatprep.subr.bf16.mxu0 0
    %529 = vmatpush1.bf16.msra.mxu0 0
    %530 = vmatprep.subr.bf16.mxu0 0
    %531 = vmatpush1.bf16.msra.mxu0 0
    %532 = vmatprep.subr.bf16.mxu0 0
    %533 = vmatpush1.bf16.msra.mxu0 0
    %534 = vmatprep.subr.bf16.mxu0 0
    %535 = vmatpush1.bf16.msra.mxu0 0
    %536 = vmatprep.subr.bf16.mxu0 0
    %537 = vmatpush1.bf16.msra.mxu0 0
    %538 = vmatprep.subr.bf16.mxu0 0
    %539 = vmatpush1.bf16.msra.mxu0 0
    %540 = vmatprep.subr.bf16.mxu0 0
    %541 = vmatpush1.bf16.msra.mxu0 0
    %542 = vmatprep.subr.bf16.mxu0 0
    %543 = vmatpush1.bf16.msra.mxu0 0
    %544 = vmatprep.subr.bf16.mxu0 0
    %545 = vmatpush1.bf16.msra.mxu0 0
    %546 = vmatprep.mubr.bf16.mxu0 0
    %547 = vmatmul.mubr.bf16.gmra.mrb[0].mxu0 %v512
    %v548 = vpop.f32.mrb[0].mxu0
    %v549 = vadd.f32 0.0, %v548
    %v550 = vpop.f32.mrb[0].mxu0
    %v551 = vpop.f32.mrb[0].mxu0
    %v552 = vadd.f32 0.0, %v551
    %v553 = vpop.f32.mrb[0].mxu0
    %554 = vdwg.mxu0
    %v556 = vlaneseq
    %v557 = vshrl.u32 %v556, 7
    %v558 = vsub.s32 0, %v557
    %v559 = vrot.slane %v301, %v558
    %560 = vrot.lane.b32.xlu0 %v559, 32
    %v561 = vpop.permute.xlu0 %560
    %v563 = vadd.f32 %v549, %v561
    %v564 = vadd.f32 %v552, %v561
    %v567 = vcombine.high %v563, %v563
    %v569 = vunpack.c.l.s4 1966171168
    %v570 = vunpack.c.0.s8 %v569
    %v571 = vlaneseq
    %v572 = vshrl.u32 %v571, 7
    %v573 = vsub.s32 %v570, %v572
    %v574 = vrot.slane %v563, %v573
    %v576 = vunpack.c.l.s4 1966171168
    %v577 = vunpack.c.0.s8 %v576
    %v578 = vlaneseq
    %v579 = vshrl.u32 %v578, 7
    %v580 = vsub.s32 %v577, %v579
    %v581 = vrot.slane %v567, %v580
    %v582 = vcombine.high %v574, %v574
    %v583 = vcombine.high %v581, %v581
    %v585 = vunpack.c.l.s4 1966171168
    %v586 = vunpack.c.0.s8 %v585
    %v587 = vlaneseq
    %v588 = vshrl.u32 %v587, 7
    %v589 = vsub.s32 %v586, %v588
    %v590 = vrot.slane %v574, %v589
    %v592 = vunpack.c.l.s4 1966171168
    %v593 = vunpack.c.0.s8 %v592
    %v594 = vlaneseq
    %v595 = vshrl.u32 %v594, 7
    %v596 = vsub.s32 %v593, %v595
    %v597 = vrot.slane %v581, %v596
    %v599 = vunpack.c.l.s4 1966171168
    %v600 = vunpack.c.0.s8 %v599
    %v601 = vlaneseq
    %v602 = vshrl.u32 %v601, 7
    %v603 = vsub.s32 %v600, %v602
    %v604 = vrot.slane %v582, %v603
    %v606 = vunpack.c.l.s4 1966171168
    %v607 = vunpack.c.0.s8 %v606
    %v608 = vlaneseq
    %v609 = vshrl.u32 %v608, 7
    %v610 = vsub.s32 %v607, %v609
    %v611 = vrot.slane %v583, %v610
    %v612 = vcombine.high %v590, %v590
    %v613 = vcombine.high %v597, %v597
    %v614 = vcombine.high %v604, %v604
    %v615 = vcombine.high %v611, %v611
    %v616 = vcombine.high %v564, %v564
    %v618 = vunpack.c.l.s4 1966171168
    %v619 = vunpack.c.0.s8 %v618
    %v620 = vlaneseq
    %v621 = vshrl.u32 %v620, 7
    %v622 = vsub.s32 %v619, %v621
    %v623 = vrot.slane %v564, %v622
    %v625 = vunpack.c.l.s4 1966171168
    %v626 = vunpack.c.0.s8 %v625
    %v627 = vlaneseq
    %v628 = vshrl.u32 %v627, 7
    %v629 = vsub.s32 %v626, %v628
    %v630 = vrot.slane %v616, %v629
    %v631 = vcombine.high %v623, %v623
    %v632 = vcombine.high %v630, %v630
    %v634 = vunpack.c.l.s4 1966171168
    %v635 = vunpack.c.0.s8 %v634
    %v636 = vlaneseq
    %v637 = vshrl.u32 %v636, 7
    %v638 = vsub.s32 %v635, %v637
    %v639 = vrot.slane %v623, %v638
    %v641 = vunpack.c.l.s4 1966171168
    %v642 = vunpack.c.0.s8 %v641
    %v643 = vlaneseq
    %v644 = vshrl.u32 %v643, 7
    %v645 = vsub.s32 %v642, %v644
    %v646 = vrot.slane %v630, %v645
    %v648 = vunpack.c.l.s4 1966171168
    %v649 = vunpack.c.0.s8 %v648
    %v650 = vlaneseq
    %v651 = vshrl.u32 %v650, 7
    %v652 = vsub.s32 %v649, %v651
    %v653 = vrot.slane %v631, %v652
    %v655 = vunpack.c.l.s4 1966171168
    %v656 = vunpack.c.0.s8 %v655
    %v657 = vlaneseq
    %v658 = vshrl.u32 %v657, 7
    %v659 = vsub.s32 %v656, %v658
    %v660 = vrot.slane %v632, %v659
    %v661 = vcombine.high %v639, %v639
    %v662 = vcombine.high %v646, %v646
    %v663 = vcombine.high %v653, %v653
    %v664 = vcombine.high %v660, %v660
    %v665 = vlaneseq
    %v666 = vshrl.u32 %v665, 7
    %v667 = vsub.s32 0, %v666
    %v668 = vrot.slane %v590, %v667
    %v669 = vlaneseq
    %v670 = vshrl.u32 %v669, 7
    %v671 = vsub.s32 0, %v670
    %v672 = vrot.slane %v604, %v671
    %v673 = vlaneseq
    %v674 = vshrl.u32 %v673, 7
    %v675 = vsub.s32 0, %v674
    %v676 = vrot.slane %v612, %v675
    %v677 = vlaneseq
    %v678 = vshrl.u32 %v677, 7
    %v679 = vsub.s32 0, %v678
    %v680 = vrot.slane %v614, %v679
    %v681 = vlaneseq
    %v682 = vshrl.u32 %v681, 7
    %v683 = vsub.s32 0, %v682
    %v684 = vrot.slane %v597, %v683
    %v685 = vlaneseq
    %v686 = vshrl.u32 %v685, 7
    %v687 = vsub.s32 0, %v686
    %v688 = vrot.slane %v611, %v687
    %v689 = vlaneseq
    %v690 = vshrl.u32 %v689, 7
    %v691 = vsub.s32 0, %v690
    %v692 = vrot.slane %v613, %v691
    %v693 = vlaneseq
    %v694 = vshrl.u32 %v693, 7
    %v695 = vsub.s32 0, %v694
    %v696 = vrot.slane %v615, %v695
    %v697 = vlaneseq
    %v698 = vshrl.u32 %v697, 7
    %v699 = vsub.s32 0, %v698
    %v700 = vrot.slane %v639, %v699
    %v701 = vlaneseq
    %v702 = vshrl.u32 %v701, 7
    %v703 = vsub.s32 0, %v702
    %v704 = vrot.slane %v653, %v703
    %v705 = vlaneseq
    %v706 = vshrl.u32 %v705, 7
    %v707 = vsub.s32 0, %v706
    %v708 = vrot.slane %v661, %v707
    %v709 = vlaneseq
    %v710 = vshrl.u32 %v709, 7
    %v711 = vsub.s32 0, %v710
    %v712 = vrot.slane %v663, %v711
    %v713 = vlaneseq
    %v714 = vshrl.u32 %v713, 7
    %v715 = vsub.s32 0, %v714
    %v716 = vrot.slane %v646, %v715
    %v717 = vlaneseq
    %v718 = vshrl.u32 %v717, 7
    %v719 = vsub.s32 0, %v718
    %v720 = vrot.slane %v660, %v719
    %v721 = vlaneseq
    %v722 = vshrl.u32 %v721, 7
    %v723 = vsub.s32 0, %v722
    %v724 = vrot.slane %v662, %v723
    %v725 = vlaneseq
    %v726 = vshrl.u32 %v725, 7
    %v727 = vsub.s32 0, %v726
    %v728 = vrot.slane %v664, %v727
    %747 = vrot.lane.b32.xlu0 %v549, 32
    %v748 = vpop.permute.xlu0 %747
    %749 = vrot.lane.b32.xlu0 %v552, 32
    %v750 = vpop.permute.xlu0 %749
    %v753 = vadd.f32 %v668, %v748
    %v754 = vadd.f32 %v672, %v748
    %v755 = vadd.f32 %v676, %v748
    %v756 = vadd.f32 %v680, %v748
    %v757 = vadd.f32 %v684, %v748
    %v758 = vadd.f32 %v688, %v748
    %v759 = vadd.f32 %v692, %v748
    %v760 = vadd.f32 %v696, %v748
    %v761 = vadd.f32 %v700, %v750
    %v762 = vadd.f32 %v704, %v750
    %v763 = vadd.f32 %v708, %v750
    %v764 = vadd.f32 %v712, %v750
    %v765 = vadd.f32 %v716, %v750
    %v766 = vadd.f32 %v720, %v750
    %v767 = vadd.f32 %v724, %v750
    %v768 = vadd.f32 %v728, %v750
    %v769 = vlaneseq
    %v770 = vshrl.u32 %v769, 7
    %v771 = vsub.s32 0, %v770
    %v772 = vrot.slane %v495, %v771
    %774 = vbcast.lane.b32.xlu0 %v772, 256
    %v775 = vpop.permute.xlu0 %774
    %v776 = vlaneseq
    %v777 = vshrl.u32 %v776, 7
    %v778 = vsub.s32 1, %v777
    %v779 = vrot.slane %v495, %v778
    %781 = vbcast.lane.b32.xlu0 %v779, 256
    %v782 = vpop.permute.xlu0 %781
    %v783 = vlaneseq
    %v784 = vshrl.u32 %v783, 7
    %v785 = vsub.s32 2, %v784
    %v786 = vrot.slane %v495, %v785
    %788 = vbcast.lane.b32.xlu0 %v786, 256
    %v789 = vpop.permute.xlu0 %788
    %v790 = vlaneseq
    %v791 = vshrl.u32 %v790, 7
    %v792 = vsub.s32 3, %v791
    %v793 = vrot.slane %v495, %v792
    %795 = vbcast.lane.b32.xlu0 %v793, 256
    %v796 = vpop.permute.xlu0 %795
    %v797 = vlaneseq
    %v798 = vshrl.u32 %v797, 7
    %v799 = vsub.s32 4, %v798
    %v800 = vrot.slane %v495, %v799
    %802 = vbcast.lane.b32.xlu0 %v800, 256
    %v803 = vpop.permute.xlu0 %802
    %v804 = vlaneseq
    %v805 = vshrl.u32 %v804, 7
    %v806 = vsub.s32 5, %v805
    %v807 = vrot.slane %v495, %v806
    %809 = vbcast.lane.b32.xlu0 %v807, 256
    %v810 = vpop.permute.xlu0 %809
    %v811 = vlaneseq
    %v812 = vshrl.u32 %v811, 7
    %v813 = vsub.s32 6, %v812
    %v814 = vrot.slane %v495, %v813
    %816 = vbcast.lane.b32.xlu0 %v814, 256
    %v817 = vpop.permute.xlu0 %816
    %v818 = vlaneseq
    %v819 = vshrl.u32 %v818, 7
    %v820 = vsub.s32 7, %v819
    %v821 = vrot.slane %v495, %v820
    %823 = vbcast.lane.b32.xlu0 %v821, 256
    %v824 = vpop.permute.xlu0 %823
    %v825 = vlaneseq
    %v826 = vshrl.u32 %v825, 7
    %v827 = vsub.s32 0, %v826
    %v828 = vrot.slane %v496, %v827
    %830 = vbcast.lane.b32.xlu0 %v828, 256
    %v831 = vpop.permute.xlu0 %830
    %v832 = vlaneseq
    %v833 = vshrl.u32 %v832, 7
    %v834 = vsub.s32 1, %v833
    %v835 = vrot.slane %v496, %v834
    %837 = vbcast.lane.b32.xlu0 %v835, 256
    %v838 = vpop.permute.xlu0 %837
    %v839 = vlaneseq
    %v840 = vshrl.u32 %v839, 7
    %v841 = vsub.s32 2, %v840
    %v842 = vrot.slane %v496, %v841
    %844 = vbcast.lane.b32.xlu0 %v842, 256
    %v845 = vpop.permute.xlu0 %844
    %v846 = vlaneseq
    %v847 = vshrl.u32 %v846, 7
    %v848 = vsub.s32 3, %v847
    %v849 = vrot.slane %v496, %v848
    %851 = vbcast.lane.b32.xlu0 %v849, 256
    %v852 = vpop.permute.xlu0 %851
    %v853 = vlaneseq
    %v854 = vshrl.u32 %v853, 7
    %v855 = vsub.s32 4, %v854
    %v856 = vrot.slane %v496, %v855
    %858 = vbcast.lane.b32.xlu0 %v856, 256
    %v859 = vpop.permute.xlu0 %858
    %v860 = vlaneseq
    %v861 = vshrl.u32 %v860, 7
    %v862 = vsub.s32 5, %v861
    %v863 = vrot.slane %v496, %v862
    %865 = vbcast.lane.b32.xlu0 %v863, 256
    %v866 = vpop.permute.xlu0 %865
    %v867 = vlaneseq
    %v868 = vshrl.u32 %v867, 7
    %v869 = vsub.s32 6, %v868
    %v870 = vrot.slane %v496, %v869
    %872 = vbcast.lane.b32.xlu0 %v870, 256
    %v873 = vpop.permute.xlu0 %872
    %v874 = vlaneseq
    %v875 = vshrl.u32 %v874, 7
    %v876 = vsub.s32 7, %v875
    %v877 = vrot.slane %v496, %v876
    %879 = vbcast.lane.b32.xlu0 %v877, 256
    %v880 = vpop.permute.xlu0 %879
    %v882 = vlaneseq
    %v883 = vshrl.u32 %v882, 7
    %v884 = vsub.s32 0, %v883
    %v885 = vrot.slane %v300, %v884
    %v887 = vmul.f32 %v775, %v885
    %v888 = vmul.f32 %v782, %v885
    %v889 = vmul.f32 %v789, %v885
    %v890 = vmul.f32 %v796, %v885
    %v891 = vmul.f32 %v803, %v885
    %v892 = vmul.f32 %v810, %v885
    %v893 = vmul.f32 %v817, %v885
    %v894 = vmul.f32 %v824, %v885
    %v895 = vmul.f32 %v831, %v885
    %v896 = vmul.f32 %v838, %v885
    %v897 = vmul.f32 %v845, %v885
    %v898 = vmul.f32 %v852, %v885
    %v899 = vmul.f32 %v859, %v885
    %v900 = vmul.f32 %v866, %v885
    %v901 = vmul.f32 %v873, %v885
    %v902 = vmul.f32 %v880, %v885
    %919 = vrot.lane.b32.xlu0 %v887, 32
    %v920 = vpop.permute.xlu0 %919
    %921 = vrot.lane.b32.xlu0 %v888, 32
    %v922 = vpop.permute.xlu0 %921
    %923 = vrot.lane.b32.xlu0 %v889, 32
    %v924 = vpop.permute.xlu0 %923
    %925 = vrot.lane.b32.xlu0 %v890, 32
    %v926 = vpop.permute.xlu0 %925
    %927 = vrot.lane.b32.xlu0 %v891, 32
    %v928 = vpop.permute.xlu0 %927
    %929 = vrot.lane.b32.xlu0 %v892, 32
    %v930 = vpop.permute.xlu0 %929
    %931 = vrot.lane.b32.xlu0 %v893, 32
    %v932 = vpop.permute.xlu0 %931
    %933 = vrot.lane.b32.xlu0 %v894, 32
    %v934 = vpop.permute.xlu0 %933
    %935 = vrot.lane.b32.xlu0 %v895, 32
    %v936 = vpop.permute.xlu0 %935
    %937 = vrot.lane.b32.xlu0 %v896, 32
    %v938 = vpop.permute.xlu0 %937
    %939 = vrot.lane.b32.xlu0 %v897, 32
    %v940 = vpop.permute.xlu0 %939
    %941 = vrot.lane.b32.xlu0 %v898, 32
    %v942 = vpop.permute.xlu0 %941
    %943 = vrot.lane.b32.xlu0 %v899, 32
    %v944 = vpop.permute.xlu0 %943
    %945 = vrot.lane.b32.xlu0 %v900, 32
    %v946 = vpop.permute.xlu0 %945
    %947 = vrot.lane.b32.xlu0 %v901, 32
    %v948 = vpop.permute.xlu0 %947
    %949 = vrot.lane.b32.xlu0 %v902, 32
    %v950 = vpop.permute.xlu0 %949
    %v967 = vadd.f32 %v753, %v920
    %v968 = vadd.f32 %v754, %v922
    %v969 = vadd.f32 %v755, %v924
    %v970 = vadd.f32 %v756, %v926
    %v971 = vadd.f32 %v757, %v928
    %v972 = vadd.f32 %v758, %v930
    %v973 = vadd.f32 %v759, %v932
    %v974 = vadd.f32 %v760, %v934
    %v975 = vadd.f32 %v761, %v936
    %v976 = vadd.f32 %v762, %v938
    %v977 = vadd.f32 %v763, %v940
    %v978 = vadd.f32 %v764, %v942
    %v979 = vadd.f32 %v765, %v944
    %v980 = vadd.f32 %v766, %v946
    %v981 = vadd.f32 %v767, %v948
    %v982 = vadd.f32 %v768, %v950
    %v983 = vtanh.pop %v967
    %v984 = vtanh.pop %v968
    %v985 = vtanh.pop %v969
    %v986 = vtanh.pop %v970
    %v987 = vtanh.pop %v971
    %v988 = vtanh.pop %v972
    %v989 = vtanh.pop %v973
    %v990 = vtanh.pop %v974
    %v991 = vtanh.pop %v975
    %v992 = vtanh.pop %v976
    %v993 = vtanh.pop %v977
    %v994 = vtanh.pop %v978
    %v995 = vtanh.pop %v979
    %v996 = vtanh.pop %v980
    %v997 = vtanh.pop %v981
    %v998 = vtanh.pop %v982
    %v999 = vpack.c.bf16 %v984, %v983
    %v1000 = vpack.c.bf16 %v986, %v985
    %v1001 = vpack.c.bf16 %v988, %v987
    %v1002 = vpack.c.bf16 %v990, %v989
    %v1003 = vpack.c.bf16 %v992, %v991
    %v1004 = vpack.c.bf16 %v994, %v993
    %v1005 = vpack.c.bf16 %v996, %v995
    %v1006 = vpack.c.bf16 %v998, %v997
    %v1008 = vlaneseq
    %v1009 = vshrl.u32 %v1008, 7
    %v1010 = vsub.s32 0, %v1009
    %v1011 = vrot.slane %v306, %v1010
    %1021 = vrot.lane.b32.xlu0 %v999, 96
    %v1022 = vpop.permute.xlu0 %1021
    %1023 = vrot.lane.b32.xlu0 %v1000, 96
    %v1024 = vpop.permute.xlu0 %1023
    %1025 = vrot.lane.b32.xlu0 %v1001, 96
    %v1026 = vpop.permute.xlu0 %1025
    %1027 = vrot.lane.b32.xlu0 %v1002, 96
    %v1028 = vpop.permute.xlu0 %1027
    %1029 = vrot.lane.b32.xlu0 %v1003, 96
    %v1030 = vpop.permute.xlu0 %1029
    %1031 = vrot.lane.b32.xlu0 %v1004, 96
    %v1032 = vpop.permute.xlu0 %1031
    %1033 = vrot.lane.b32.xlu0 %v1005, 96
    %v1034 = vpop.permute.xlu0 %1033
    %1035 = vrot.lane.b32.xlu0 %v1006, 96
    %v1036 = vpop.permute.xlu0 %1035
    %v1041 = vunpack.c.l.b16 %v302
    %v1042 = vunpack.c.l.b16 %v303
    %v1043 = vunpack.c.l.b16 %v304
    %v1044 = vunpack.c.l.b16 %v305
    %v1045 = vpack.c.b16 %v1042, %v1041
    %v1046 = vpack.c.b16 %v1044, %v1043
    %v1050 = vsel %vm510, %v1022, 0
    %v1053 = vsel %vm510, %v1024, 0
    %v1056 = vsel %vm510, %v1026, 0
    %v1059 = vsel %vm510, %v1028, 0
    %v1062 = vsel %vm510, %v1030, 0
    %v1065 = vsel %vm510, %v1032, 0
    %v1068 = vsel %vm510, %v1034, 0
    %v1071 = vsel %vm510, %v1036, 0
    %1073 = vmatprep.subr.bf16.mxu0 0
    %1074 = vmatpush1.bf16.msra.mxu0 %v1045
    %1075 = vmatprep.subr.bf16.mxu0 0
    %1076 = vmatpush1.bf16.msra.mxu0 %v1046
    %1077 = vmatprep.subr.bf16.mxu0 0
    %1078 = vmatpush1.bf16.msra.mxu0 0
    %1079 = vmatprep.subr.bf16.mxu0 0
    %1080 = vmatpush1.bf16.msra.mxu0 0
    %1081 = vmatprep.subr.bf16.mxu0 0
    %1082 = vmatpush1.bf16.msra.mxu0 0
    %1083 = vmatprep.subr.bf16.mxu0 0
    %1084 = vmatpush1.bf16.msra.mxu0 0
    %1085 = vmatprep.subr.bf16.mxu0 0
    %1086 = vmatpush1.bf16.msra.mxu0 0
    %1087 = vmatprep.subr.bf16.mxu0 0
    %1088 = vmatpush1.bf16.msra.mxu0 0
    %1089 = vmatprep.subr.bf16.mxu0 0
    %1090 = vmatpush1.bf16.msra.mxu0 0
    %1091 = vmatprep.subr.bf16.mxu0 0
    %1092 = vmatpush1.bf16.msra.mxu0 0
    %1093 = vmatprep.subr.bf16.mxu0 0
    %1094 = vmatpush1.bf16.msra.mxu0 0
    %1095 = vmatprep.subr.bf16.mxu0 0
    %1096 = vmatpush1.bf16.msra.mxu0 0
    %1097 = vmatprep.subr.bf16.mxu0 0
    %1098 = vmatpush1.bf16.msra.mxu0 0
    %1099 = vmatprep.subr.bf16.mxu0 0
    %1100 = vmatpush1.bf16.msra.mxu0 0
    %1101 = vmatprep.subr.bf16.mxu0 0
    %1102 = vmatpush1.bf16.msra.mxu0 0
    %1103 = vmatprep.subr.bf16.mxu0 0
    %1104 = vmatpush1.bf16.msra.mxu0 0
    %1105 = vmatprep.mubr.bf16.mxu0 0
    %1106 = vmatmul.mubr.bf16.gmra.mrb[0].mxu0 %v1050
    %v1107 = vpop.f32.mrb[0].mxu0
    %v1108 = vadd.f32 %v1011, %v1107
    %v1109 = vpop.f32.mrb[0].mxu0
    %v1110 = vpop.f32.mrb[0].mxu0
    %v1111 = vadd.f32 %v1011, %v1110
    %v1112 = vpop.f32.mrb[0].mxu0
    %1113 = vmatprep.mubr.bf16.mxu0 0
    %1114 = vmatmul.mubr.bf16.gmra.mrb[0].mxu0 %v1053
    %v1115 = vpop.f32.mrb[0].mxu0
    %v1116 = vadd.f32 %v1011, %v1115
    %v1117 = vpop.f32.mrb[0].mxu0
    %v1118 = vpop.f32.mrb[0].mxu0
    %v1119 = vadd.f32 %v1011, %v1118
    %v1120 = vpop.f32.mrb[0].mxu0
    %1121 = vmatprep.mubr.bf16.mxu0 0
    %1122 = vmatmul.mubr.bf16.gmra.mrb[0].mxu0 %v1056
    %v1123 = vpop.f32.mrb[0].mxu0
    %v1124 = vadd.f32 %v1011, %v1123
    %v1125 = vpop.f32.mrb[0].mxu0
    %v1126 = vpop.f32.mrb[0].mxu0
    %v1127 = vadd.f32 %v1011, %v1126
    %v1128 = vpop.f32.mrb[0].mxu0
    %1129 = vmatprep.mubr.bf16.mxu0 0
    %1130 = vmatmul.mubr.bf16.gmra.mrb[0].mxu0 %v1059
    %v1131 = vpop.f32.mrb[0].mxu0
    %v1132 = vadd.f32 %v1011, %v1131
    %v1133 = vpop.f32.mrb[0].mxu0
    %v1134 = vpop.f32.mrb[0].mxu0
    %v1135 = vadd.f32 %v1011, %v1134
    %v1136 = vpop.f32.mrb[0].mxu0
    %1137 = vmatprep.mubr.bf16.mxu0 0
    %1138 = vmatmul.mubr.bf16.gmra.mrb[0].mxu0 %v1062
    %v1139 = vpop.f32.mrb[0].mxu0
    %v1140 = vadd.f32 %v1011, %v1139
    %v1141 = vpop.f32.mrb[0].mxu0
    %v1142 = vpop.f32.mrb[0].mxu0
    %v1143 = vadd.f32 %v1011, %v1142
    %v1144 = vpop.f32.mrb[0].mxu0
    %1145 = vmatprep.mubr.bf16.mxu0 0
    %1146 = vmatmul.mubr.bf16.gmra.mrb[0].mxu0 %v1065
    %v1147 = vpop.f32.mrb[0].mxu0
    %v1148 = vadd.f32 %v1011, %v1147
    %v1149 = vpop.f32.mrb[0].mxu0
    %v1150 = vpop.f32.mrb[0].mxu0
    %v1151 = vadd.f32 %v1011, %v1150
    %v1152 = vpop.f32.mrb[0].mxu0
    %1153 = vmatprep.mubr.bf16.mxu0 0
    %1154 = vmatmul.mubr.bf16.gmra.mrb[0].mxu0 %v1068
    %v1155 = vpop.f32.mrb[0].mxu0
    %v1156 = vadd.f32 %v1011, %v1155
    %v1157 = vpop.f32.mrb[0].mxu0
    %v1158 = vpop.f32.mrb[0].mxu0
    %v1159 = vadd.f32 %v1011, %v1158
    %v1160 = vpop.f32.mrb[0].mxu0
    %1161 = vmatprep.mubr.bf16.mxu0 0
    %1162 = vmatmul.mubr.bf16.gmra.mrb[0].mxu0 %v1071
    %v1163 = vpop.f32.mrb[0].mxu0
    %v1164 = vadd.f32 %v1011, %v1163
    %v1165 = vpop.f32.mrb[0].mxu0
    %v1166 = vpop.f32.mrb[0].mxu0
    %v1167 = vadd.f32 %v1011, %v1166
    %v1168 = vpop.f32.mrb[0].mxu0
    %1169 = vdwg.mxu0
    %v1170 = vtanh.pop %v1108
    %v1171 = vtanh.pop %v1111
    %v1172 = vtanh.pop %v1116
    %v1173 = vtanh.pop %v1119
    %v1174 = vtanh.pop %v1124
    %v1175 = vtanh.pop %v1127
    %v1176 = vtanh.pop %v1132
    %v1177 = vtanh.pop %v1135
    %v1178 = vtanh.pop %v1140
    %v1179 = vtanh.pop %v1143
    %v1180 = vtanh.pop %v1148
    %v1181 = vtanh.pop %v1151
    %v1182 = vtanh.pop %v1156
    %v1183 = vtanh.pop %v1159
    %v1184 = vtanh.pop %v1164
    %v1185 = vtanh.pop %v1167
    %v1186 = vpack.c.bf16 %v1171, %v1170
    %v1187 = vpack.c.bf16 %v1173, %v1172
    %v1188 = vpack.c.bf16 %v1175, %v1174
    %v1189 = vpack.c.bf16 %v1177, %v1176
    %v1190 = vpack.c.bf16 %v1179, %v1178
    %v1191 = vpack.c.bf16 %v1181, %v1180
    %v1192 = vpack.c.bf16 %v1183, %v1182
    %v1193 = vpack.c.bf16 %v1185, %v1184
    %v1195 = vlaneseq
    %v1196 = vshrl.u32 %v1195, 7
    %v1197 = vsub.s32 0, %v1196
    %v1198 = vrot.slane %v311, %v1197
    %v1204 = vunpack.c.l.b16 %v307
    %v1205 = vunpack.c.l.b16 %v308
    %v1206 = vunpack.c.l.b16 %v309
    %v1207 = vunpack.c.l.b16 %v310
    %v1208 = vpack.c.b16 %v1205, %v1204
    %v1209 = vpack.c.b16 %v1207, %v1206
    %v1213 = vsel %vm510, %v1186, 0
    %v1216 = vsel %vm510, %v1187, 0
    %v1219 = vsel %vm510, %v1188, 0
    %v1222 = vsel %vm510, %v1189, 0
    %v1225 = vsel %vm510, %v1190, 0
    %v1228 = vsel %vm510, %v1191, 0
    %v1231 = vsel %vm510, %v1192, 0
    %v1234 = vsel %vm510, %v1193, 0
    %1236 = vmatprep.subr.bf16.mxu0 0
    %1237 = vmatpush1.bf16.msra.mxu0 %v1208
    %1238 = vmatprep.subr.bf16.mxu0 0
    %1239 = vmatpush1.bf16.msra.mxu0 %v1209
    %1240 = vmatprep.subr.bf16.mxu0 0
    %1241 = vmatpush1.bf16.msra.mxu0 0
    %1242 = vmatprep.subr.bf16.mxu0 0
    %1243 = vmatpush1.bf16.msra.mxu0 0
    %1244 = vmatprep.subr.bf16.mxu0 0
    %1245 = vmatpush1.bf16.msra.mxu0 0
    %1246 = vmatprep.subr.bf16.mxu0 0
    %1247 = vmatpush1.bf16.msra.mxu0 0
    %1248 = vmatprep.subr.bf16.mxu0 0
    %1249 = vmatpush1.bf16.msra.mxu0 0
    %1250 = vmatprep.subr.bf16.mxu0 0
    %1251 = vmatpush1.bf16.msra.mxu0 0
    %1252 = vmatprep.subr.bf16.mxu0 0
    %1253 = vmatpush1.bf16.msra.mxu0 0
    %1254 = vmatprep.subr.bf16.mxu0 0
    %1255 = vmatpush1.bf16.msra.mxu0 0
    %1256 = vmatprep.subr.bf16.mxu0 0
    %1257 = vmatpush1.bf16.msra.mxu0 0
    %1258 = vmatprep.subr.bf16.mxu0 0
    %1259 = vmatpush1.bf16.msra.mxu0 0
    %1260 = vmatprep.subr.bf16.mxu0 0
    %1261 = vmatpush1.bf16.msra.mxu0 0
    %1262 = vmatprep.subr.bf16.mxu0 0
    %1263 = vmatpush1.bf16.msra.mxu0 0
    %1264 = vmatprep.subr.bf16.mxu0 0
    %1265 = vmatpush1.bf16.msra.mxu0 0
    %1266 = vmatprep.subr.bf16.mxu0 0
    %1267 = vmatpush1.bf16.msra.mxu0 0
    %1268 = vmatprep.mubr.bf16.mxu0 0
    %1269 = vmatmul.mubr.bf16.gmra.mrb[0].mxu0 %v1213
    %v1270 = vpop.f32.mrb[0].mxu0
    %v1271 = vadd.f32 %v1198, %v1270
    %v1272 = vpop.f32.mrb[0].mxu0
    %v1273 = vpop.f32.mrb[0].mxu0
    %v1274 = vadd.f32 %v1198, %v1273
    %v1275 = vpop.f32.mrb[0].mxu0
    %1276 = vmatprep.mubr.bf16.mxu0 0
    %1277 = vmatmul.mubr.bf16.gmra.mrb[0].mxu0 %v1216
    %v1278 = vpop.f32.mrb[0].mxu0
    %v1279 = vadd.f32 %v1198, %v1278
    %v1280 = vpop.f32.mrb[0].mxu0
    %v1281 = vpop.f32.mrb[0].mxu0
    %v1282 = vadd.f32 %v1198, %v1281
    %v1283 = vpop.f32.mrb[0].mxu0
    %1284 = vmatprep.mubr.bf16.mxu0 0
    %1285 = vmatmul.mubr.bf16.gmra.mrb[0].mxu0 %v1219
    %v1286 = vpop.f32.mrb[0].mxu0
    %v1287 = vadd.f32 %v1198, %v1286
    %v1288 = vpop.f32.mrb[0].mxu0
    %v1289 = vpop.f32.mrb[0].mxu0
    %v1290 = vadd.f32 %v1198, %v1289
    %v1291 = vpop.f32.mrb[0].mxu0
    %1292 = vmatprep.mubr.bf16.mxu0 0
    %1293 = vmatmul.mubr.bf16.gmra.mrb[0].mxu0 %v1222
    %v1294 = vpop.f32.mrb[0].mxu0
    %v1295 = vadd.f32 %v1198, %v1294
    %v1296 = vpop.f32.mrb[0].mxu0
    %v1297 = vpop.f32.mrb[0].mxu0
    %v1298 = vadd.f32 %v1198, %v1297
    %v1299 = vpop.f32.mrb[0].mxu0
    %1300 = vmatprep.mubr.bf16.mxu0 0
    %1301 = vmatmul.mubr.bf16.gmra.mrb[0].mxu0 %v1225
    %v1302 = vpop.f32.mrb[0].mxu0
    %v1303 = vadd.f32 %v1198, %v1302
    %v1304 = vpop.f32.mrb[0].mxu0
    %v1305 = vpop.f32.mrb[0].mxu0
    %v1306 = vadd.f32 %v1198, %v1305
    %v1307 = vpop.f32.mrb[0].mxu0
    %1308 = vmatprep.mubr.bf16.mxu0 0
    %1309 = vmatmul.mubr.bf16.gmra.mrb[0].mxu0 %v1228
    %v1310 = vpop.f32.mrb[0].mxu0
    %v1311 = vadd.f32 %v1198, %v1310
    %v1312 = vpop.f32.mrb[0].mxu0
    %v1313 = vpop.f32.mrb[0].mxu0
    %v1314 = vadd.f32 %v1198, %v1313
    %v1315 = vpop.f32.mrb[0].mxu0
    %1316 = vmatprep.mubr.bf16.mxu0 0
    %1317 = vmatmul.mubr.bf16.gmra.mrb[0].mxu0 %v1231
    %v1318 = vpop.f32.mrb[0].mxu0
    %v1319 = vadd.f32 %v1198, %v1318
    %v1320 = vpop.f32.mrb[0].mxu0
    %v1321 = vpop.f32.mrb[0].mxu0
    %v1322 = vadd.f32 %v1198, %v1321
    %v1323 = vpop.f32.mrb[0].mxu0
    %1324 = vmatprep.mubr.bf16.mxu0 0
    %1325 = vmatmul.mubr.bf16.gmra.mrb[0].mxu0 %v1234
    %v1326 = vpop.f32.mrb[0].mxu0
    %v1327 = vadd.f32 %v1198, %v1326
    %v1328 = vpop.f32.mrb[0].mxu0
    %v1329 = vpop.f32.mrb[0].mxu0
    %v1330 = vadd.f32 %v1198, %v1329
    %v1331 = vpop.f32.mrb[0].mxu0
    %1332 = vdwg.mxu0
    %v1333 = vxor.u32 %v1271, 2147483648
    %v1334 = vxor.u32 %v1274, 2147483648
    %v1335 = vxor.u32 %v1279, 2147483648
    %v1336 = vxor.u32 %v1282, 2147483648
    %v1337 = vxor.u32 %v1287, 2147483648
    %v1338 = vxor.u32 %v1290, 2147483648
    %v1339 = vxor.u32 %v1295, 2147483648
    %v1340 = vxor.u32 %v1298, 2147483648
    %v1341 = vxor.u32 %v1303, 2147483648
    %v1342 = vxor.u32 %v1306, 2147483648
    %v1343 = vxor.u32 %v1311, 2147483648
    %v1344 = vxor.u32 %v1314, 2147483648
    %v1345 = vxor.u32 %v1319, 2147483648
    %v1346 = vxor.u32 %v1322, 2147483648
    %v1347 = vxor.u32 %v1327, 2147483648
    %v1348 = vxor.u32 %v1330, 2147483648
    %v1349 = vmul.f32 %v1333, 1.442695
    %v1350 = vpow.pop %v1349
    %v1351 = vmul.f32 %v1334, 1.442695
    %v1352 = vpow.pop %v1351
    %v1353 = vmul.f32 %v1335, 1.442695
    %v1354 = vpow.pop %v1353
    %v1355 = vmul.f32 %v1336, 1.442695
    %v1356 = vpow.pop %v1355
    %v1357 = vmul.f32 %v1337, 1.442695
    %v1358 = vpow.pop %v1357
    %v1359 = vmul.f32 %v1338, 1.442695
    %v1360 = vpow.pop %v1359
    %v1361 = vmul.f32 %v1339, 1.442695
    %v1362 = vpow.pop %v1361
    %v1363 = vmul.f32 %v1340, 1.442695
    %v1364 = vpow.pop %v1363
    %v1365 = vmul.f32 %v1341, 1.442695
    %v1366 = vpow.pop %v1365
    %v1367 = vmul.f32 %v1342, 1.442695
    %v1368 = vpow.pop %v1367
    %v1369 = vmul.f32 %v1343, 1.442695
    %v1370 = vpow.pop %v1369
    %v1371 = vmul.f32 %v1344, 1.442695
    %v1372 = vpow.pop %v1371
    %v1373 = vmul.f32 %v1345, 1.442695
    %v1374 = vpow.pop %v1373
    %v1375 = vmul.f32 %v1346, 1.442695
    %v1376 = vpow.pop %v1375
    %v1377 = vmul.f32 %v1347, 1.442695
    %v1378 = vpow.pop %v1377
    %v1379 = vmul.f32 %v1348, 1.442695
    %v1380 = vpow.pop %v1379
    %v1381 = vadd.f32 %v1350, 1.0
    %v1382 = vadd.f32 %v1352, 1.0
    %v1383 = vadd.f32 %v1354, 1.0
    %v1384 = vadd.f32 %v1356, 1.0
    %v1385 = vadd.f32 %v1358, 1.0
    %v1386 = vadd.f32 %v1360, 1.0
    %v1387 = vadd.f32 %v1362, 1.0
    %v1388 = vadd.f32 %v1364, 1.0
    %v1389 = vadd.f32 %v1366, 1.0
    %v1390 = vadd.f32 %v1368, 1.0
    %v1391 = vadd.f32 %v1370, 1.0
    %v1392 = vadd.f32 %v1372, 1.0
    %v1393 = vadd.f32 %v1374, 1.0
    %v1394 = vadd.f32 %v1376, 1.0
    %v1395 = vadd.f32 %v1378, 1.0
    %v1396 = vadd.f32 %v1380, 1.0
    %v1397 = vrcp.pop %v1381
    %v1398 = vmul.f32 1.0, %v1397
    %v1399 = vrcp.pop %v1382
    %v1400 = vmul.f32 1.0, %v1399
    %v1401 = vrcp.pop %v1383
    %v1402 = vmul.f32 1.0, %v1401
    %v1403 = vrcp.pop %v1384
    %v1404 = vmul.f32 1.0, %v1403
    %v1405 = vrcp.pop %v1385
    %v1406 = vmul.f32 1.0, %v1405
    %v1407 = vrcp.pop %v1386
    %v1408 = vmul.f32 1.0, %v1407
    %v1409 = vrcp.pop %v1387
    %v1410 = vmul.f32 1.0, %v1409
    %v1411 = vrcp.pop %v1388
    %v1412 = vmul.f32 1.0, %v1411
    %v1413 = vrcp.pop %v1389
    %v1414 = vmul.f32 1.0, %v1413
    %v1415 = vrcp.pop %v1390
    %v1416 = vmul.f32 1.0, %v1415
    %v1417 = vrcp.pop %v1391
    %v1418 = vmul.f32 1.0, %v1417
    %v1419 = vrcp.pop %v1392
    %v1420 = vmul.f32 1.0, %v1419
    %v1421 = vrcp.pop %v1393
    %v1422 = vmul.f32 1.0, %v1421
    %v1423 = vrcp.pop %v1394
    %v1424 = vmul.f32 1.0, %v1423
    %v1425 = vrcp.pop %v1395
    %v1426 = vmul.f32 1.0, %v1425
    %v1427 = vrcp.pop %v1396
    %v1428 = vmul.f32 1.0, %v1427
    %1430 = vset.pattern.permute.xlu0 32
    %1431 = vperm.xlu0 %1430, %v1398
    %v1432 = vpop.permute.xlu0 %1431
    %1435 = vset.pattern.permute.xlu0 32
    %1436 = vperm.xlu0 %1435, %v1400
    %v1437 = vpop.permute.xlu0 %1436
    %1440 = vset.pattern.permute.xlu0 32
    %1441 = vperm.xlu0 %1440, %v1402
    %v1442 = vpop.permute.xlu0 %1441
    %1445 = vset.pattern.permute.xlu0 32
    %1446 = vperm.xlu0 %1445, %v1404
    %v1447 = vpop.permute.xlu0 %1446
    %1450 = vset.pattern.permute.xlu0 32
    %1451 = vperm.xlu0 %1450, %v1406
    %v1452 = vpop.permute.xlu0 %1451
    %1455 = vset.pattern.permute.xlu0 32
    %1456 = vperm.xlu0 %1455, %v1408
    %v1457 = vpop.permute.xlu0 %1456
    %1460 = vset.pattern.permute.xlu0 32
    %1461 = vperm.xlu0 %1460, %v1410
    %v1462 = vpop.permute.xlu0 %1461
    %1465 = vset.pattern.permute.xlu0 32
    %1466 = vperm.xlu0 %1465, %v1412
    %v1467 = vpop.permute.xlu0 %1466
    %1470 = vset.pattern.permute.xlu0 32
    %1471 = vperm.xlu0 %1470, %v1414
    %v1472 = vpop.permute.xlu0 %1471
    %1475 = vset.pattern.permute.xlu0 32
    %1476 = vperm.xlu0 %1475, %v1416
    %v1477 = vpop.permute.xlu0 %1476
    %1480 = vset.pattern.permute.xlu0 32
    %1481 = vperm.xlu0 %1480, %v1418
    %v1482 = vpop.permute.xlu0 %1481
    %1485 = vset.pattern.permute.xlu0 32
    %1486 = vperm.xlu0 %1485, %v1420
    %v1487 = vpop.permute.xlu0 %1486
    %1490 = vset.pattern.permute.xlu0 32
    %1491 = vperm.xlu0 %1490, %v1422
    %v1492 = vpop.permute.xlu0 %1491
    %1495 = vset.pattern.permute.xlu0 32
    %1496 = vperm.xlu0 %1495, %v1424
    %v1497 = vpop.permute.xlu0 %1496
    %1500 = vset.pattern.permute.xlu0 32
    %1501 = vperm.xlu0 %1500, %v1426
    %v1502 = vpop.permute.xlu0 %1501
    %1505 = vset.pattern.permute.xlu0 32
    %1506 = vperm.xlu0 %1505, %v1428
    %v1507 = vpop.permute.xlu0 %1506
    %v1509 = vmul.f32 %v1170, %v1432
    %v1510 = vmul.f32 %v1171, %v1437
    %v1511 = vmul.f32 %v1172, %v1442
    %v1512 = vmul.f32 %v1173, %v1447
    %v1513 = vmul.f32 %v1174, %v1452
    %v1514 = vmul.f32 %v1175, %v1457
    %v1515 = vmul.f32 %v1176, %v1462
    %v1516 = vmul.f32 %v1177, %v1467
    %v1517 = vmul.f32 %v1178, %v1472
    %v1518 = vmul.f32 %v1179, %v1477
    %v1519 = vmul.f32 %v1180, %v1482
    %v1520 = vmul.f32 %v1181, %v1487
    %v1521 = vmul.f32 %v1182, %v1492
    %v1522 = vmul.f32 %v1183, %v1497
    %v1523 = vmul.f32 %v1184, %v1502
    %v1524 = vmul.f32 %v1185, %v1507
    %v1525 = vmul.f32 %v1509, %v183
    %v1526 = vmul.f32 %v1510, %v190
    %v1527 = vmul.f32 %v1511, %v197
    %v1528 = vmul.f32 %v1512, %v204
    %v1529 = vmul.f32 %v1513, %v211
    %v1530 = vmul.f32 %v1514, %v218
    %v1531 = vmul.f32 %v1515, %v225
    %v1532 = vmul.f32 %v1516, %v232
    %v1533 = vmul.f32 %v1517, %v239
    %v1534 = vmul.f32 %v1518, %v246
    %v1535 = vmul.f32 %v1519, %v253
    %v1536 = vmul.f32 %v1520, %v260
    %v1537 = vmul.f32 %v1521, %v267
    %v1538 = vmul.f32 %v1522, %v274
    %v1539 = vmul.f32 %v1523, %v281
    %v1540 = vmul.f32 %v1524, %v288
    %v1541 = vsel %vm510, %v1525, 0.0
    %v1542 = vrot.slane %v1541, 4
    %v1543 = vadd.f32 %v1541, %v1542
    %v1544 = vrot.slane %v1543, 2
    %v1545 = vadd.f32 %v1543, %v1544
    %v1546 = vrot.slane %v1545, 1
    %v1547 = vadd.f32 %v1545, %v1546
    %v1548 = vsel %vm510, %v1526, 0.0
    %v1549 = vrot.slane %v1548, 4
    %v1550 = vadd.f32 %v1548, %v1549
    %v1551 = vrot.slane %v1550, 2
    %v1552 = vadd.f32 %v1550, %v1551
    %v1553 = vrot.slane %v1552, 1
    %v1554 = vadd.f32 %v1552, %v1553
    %v1555 = vsel %vm510, %v1527, 0.0
    %v1556 = vrot.slane %v1555, 4
    %v1557 = vadd.f32 %v1555, %v1556
    %v1558 = vrot.slane %v1557, 2
    %v1559 = vadd.f32 %v1557, %v1558
    %v1560 = vrot.slane %v1559, 1
    %v1561 = vadd.f32 %v1559, %v1560
    %v1562 = vsel %vm510, %v1528, 0.0
    %v1563 = vrot.slane %v1562, 4
    %v1564 = vadd.f32 %v1562, %v1563
    %v1565 = vrot.slane %v1564, 2
    %v1566 = vadd.f32 %v1564, %v1565
    %v1567 = vrot.slane %v1566, 1
    %v1568 = vadd.f32 %v1566, %v1567
    %v1569 = vsel %vm510, %v1529, 0.0
    %v1570 = vrot.slane %v1569, 4
    %v1571 = vadd.f32 %v1569, %v1570
    %v1572 = vrot.slane %v1571, 2
    %v1573 = vadd.f32 %v1571, %v1572
    %v1574 = vrot.slane %v1573, 1
    %v1575 = vadd.f32 %v1573, %v1574
    %v1576 = vsel %vm510, %v1530, 0.0
    %v1577 = vrot.slane %v1576, 4
    %v1578 = vadd.f32 %v1576, %v1577
    %v1579 = vrot.slane %v1578, 2
    %v1580 = vadd.f32 %v1578, %v1579
    %v1581 = vrot.slane %v1580, 1
    %v1582 = vadd.f32 %v1580, %v1581
    %v1583 = vsel %vm510, %v1531, 0.0
    %v1584 = vrot.slane %v1583, 4
    %v1585 = vadd.f32 %v1583, %v1584
    %v1586 = vrot.slane %v1585, 2
    %v1587 = vadd.f32 %v1585, %v1586
    %v1588 = vrot.slane %v1587, 1
    %v1589 = vadd.f32 %v1587, %v1588
    %v1590 = vsel %vm510, %v1532, 0.0
    %v1591 = vrot.slane %v1590, 4
    %v1592 = vadd.f32 %v1590, %v1591
    %v1593 = vrot.slane %v1592, 2
    %v1594 = vadd.f32 %v1592, %v1593
    %v1595 = vrot.slane %v1594, 1
    %v1596 = vadd.f32 %v1594, %v1595
    %v1597 = vsel %vm510, %v1533, 0.0
    %v1598 = vrot.slane %v1597, 4
    %v1599 = vadd.f32 %v1597, %v1598
    %v1600 = vrot.slane %v1599, 2
    %v1601 = vadd.f32 %v1599, %v1600
    %v1602 = vrot.slane %v1601, 1
    %v1603 = vadd.f32 %v1601, %v1602
    %v1604 = vsel %vm510, %v1534, 0.0
    %v1605 = vrot.slane %v1604, 4
    %v1606 = vadd.f32 %v1604, %v1605
    %v1607 = vrot.slane %v1606, 2
    %v1608 = vadd.f32 %v1606, %v1607
    %v1609 = vrot.slane %v1608, 1
    %v1610 = vadd.f32 %v1608, %v1609
    %v1611 = vsel %vm510, %v1535, 0.0
    %v1612 = vrot.slane %v1611, 4
    %v1613 = vadd.f32 %v1611, %v1612
    %v1614 = vrot.slane %v1613, 2
    %v1615 = vadd.f32 %v1613, %v1614
    %v1616 = vrot.slane %v1615, 1
    %v1617 = vadd.f32 %v1615, %v1616
    %v1618 = vsel %vm510, %v1536, 0.0
    %v1619 = vrot.slane %v1618, 4
    %v1620 = vadd.f32 %v1618, %v1619
    %v1621 = vrot.slane %v1620, 2
    %v1622 = vadd.f32 %v1620, %v1621
    %v1623 = vrot.slane %v1622, 1
    %v1624 = vadd.f32 %v1622, %v1623
    %v1625 = vsel %vm510, %v1537, 0.0
    %v1626 = vrot.slane %v1625, 4
    %v1627 = vadd.f32 %v1625, %v1626
    %v1628 = vrot.slane %v1627, 2
    %v1629 = vadd.f32 %v1627, %v1628
    %v1630 = vrot.slane %v1629, 1
    %v1631 = vadd.f32 %v1629, %v1630
    %v1632 = vsel %vm510, %v1538, 0.0
    %v1633 = vrot.slane %v1632, 4
    %v1634 = vadd.f32 %v1632, %v1633
    %v1635 = vrot.slane %v1634, 2
    %v1636 = vadd.f32 %v1634, %v1635
    %v1637 = vrot.slane %v1636, 1
    %v1638 = vadd.f32 %v1636, %v1637
    %v1639 = vsel %vm510, %v1539, 0.0
    %v1640 = vrot.slane %v1639, 4
    %v1641 = vadd.f32 %v1639, %v1640
    %v1642 = vrot.slane %v1641, 2
    %v1643 = vadd.f32 %v1641, %v1642
    %v1644 = vrot.slane %v1643, 1
    %v1645 = vadd.f32 %v1643, %v1644
    %v1646 = vsel %vm510, %v1540, 0.0
    %v1647 = vrot.slane %v1646, 4
    %v1648 = vadd.f32 %v1646, %v1647
    %v1649 = vrot.slane %v1648, 2
    %v1650 = vadd.f32 %v1648, %v1649
    %v1651 = vrot.slane %v1650, 1
    %v1652 = vadd.f32 %v1650, %v1651
    %v1653 = vpack.c.bf16 %v1547, %v1547
    %v1654 = vpack.c.bf16 %v1554, %v1554
    %v1655 = vpack.c.bf16 %v1561, %v1561
    %v1656 = vpack.c.bf16 %v1568, %v1568
    %v1657 = vpack.c.bf16 %v1575, %v1575
    %v1658 = vpack.c.bf16 %v1582, %v1582
    %v1659 = vpack.c.bf16 %v1589, %v1589
    %v1660 = vpack.c.bf16 %v1596, %v1596
    %v1661 = vpack.c.bf16 %v1603, %v1603
    %v1662 = vpack.c.bf16 %v1610, %v1610
    %v1663 = vpack.c.bf16 %v1617, %v1617
    %v1664 = vpack.c.bf16 %v1624, %v1624
    %v1665 = vpack.c.bf16 %v1631, %v1631
    %v1666 = vpack.c.bf16 %v1638, %v1638
    %v1667 = vpack.c.bf16 %v1645, %v1645
    %v1668 = vpack.c.bf16 %v1652, %v1652
    %v1670 = vlaneseq
    %v1671 = vshrl.u32 %v1670, 7
    %v1672 = vsub.s32 0, %v1671
    %v1673 = vrot.slane %v316, %v1672
    %v1691 = vunpack.c.l.b16 %v1653
    %v1692 = vunpack.c.l.b16 %v1654
    %v1693 = vunpack.c.l.b16 %v1655
    %v1694 = vunpack.c.l.b16 %v1656
    %v1695 = vunpack.c.l.b16 %v1657
    %v1696 = vunpack.c.l.b16 %v1658
    %v1697 = vunpack.c.l.b16 %v1659
    %v1698 = vunpack.c.l.b16 %v1660
    %v1699 = vunpack.c.l.b16 %v1661
    %v1700 = vunpack.c.l.b16 %v1662
    %v1701 = vunpack.c.l.b16 %v1663
    %v1702 = vunpack.c.l.b16 %v1664
    %v1703 = vunpack.c.l.b16 %v1665
    %v1704 = vunpack.c.l.b16 %v1666
    %v1705 = vunpack.c.l.b16 %v1667
    %v1706 = vunpack.c.l.b16 %v1668
    %vm1707 = vcmask 1041409
    %v1708 = vsel %vm1707, %v1692, %v1691
    %vm1709 = vcmask 1042434
    %v1710 = vsel %vm1709, %v1693, %v1708
    %vm1711 = vcmask 1043459
    %v1712 = vsel %vm1711, %v1694, %v1710
    %vm1713 = vcmask 1044484
    %v1714 = vsel %vm1713, %v1695, %v1712
    %vm1715 = vcmask 1045509
    %v1716 = vsel %vm1715, %v1696, %v1714
    %vm1717 = vcmask 1046534
    %v1718 = vsel %vm1717, %v1697, %v1716
    %vm1719 = vcmask 1047559
    %v1720 = vsel %vm1719, %v1698, %v1718
    %v1721 = vsel %vm1707, %v1700, %v1699
    %v1722 = vsel %vm1709, %v1701, %v1721
    %v1723 = vsel %vm1711, %v1702, %v1722
    %v1724 = vsel %vm1713, %v1703, %v1723
    %v1725 = vsel %vm1715, %v1704, %v1724
    %v1726 = vsel %vm1717, %v1705, %v1725
    %v1727 = vsel %vm1719, %v1706, %v1726
    %v1728 = vpack.c.b16 %v1727, %v1720
    %v1733 = vunpack.c.l.b16 %v312
    %v1734 = vunpack.c.l.b16 %v313
    %v1735 = vunpack.c.l.b16 %v314
    %v1736 = vunpack.c.l.b16 %v315
    %v1737 = vpack.c.b16 %v1734, %v1733
    %v1738 = vpack.c.b16 %v1736, %v1735
    %v1742 = vsel %vm510, %v1728, 0
    %1744 = vmatprep.subr.bf16.mxu0 0
    %1745 = vmatpush1.bf16.msra.mxu0 %v1737
    %1746 = vmatprep.subr.bf16.mxu0 0
    %1747 = vmatpush1.bf16.msra.mxu0 %v1738
    %1748 = vmatprep.subr.bf16.mxu0 0
    %1749 = vmatpush1.bf16.msra.mxu0 0
    %1750 = vmatprep.subr.bf16.mxu0 0
    %1751 = vmatpush1.bf16.msra.mxu0 0
    %1752 = vmatprep.subr.bf16.mxu0 0
    %1753 = vmatpush1.bf16.msra.mxu0 0
    %1754 = vmatprep.subr.bf16.mxu0 0
    %1755 = vmatpush1.bf16.msra.mxu0 0
    %1756 = vmatprep.subr.bf16.mxu0 0
    %1757 = vmatpush1.bf16.msra.mxu0 0
    %1758 = vmatprep.subr.bf16.mxu0 0
    %1759 = vmatpush1.bf16.msra.mxu0 0
    %1760 = vmatprep.subr.bf16.mxu0 0
    %1761 = vmatpush1.bf16.msra.mxu0 0
    %1762 = vmatprep.subr.bf16.mxu0 0
    %1763 = vmatpush1.bf16.msra.mxu0 0
    %1764 = vmatprep.subr.bf16.mxu0 0
    %1765 = vmatpush1.bf16.msra.mxu0 0
    %1766 = vmatprep.subr.bf16.mxu0 0
    %1767 = vmatpush1.bf16.msra.mxu0 0
    %1768 = vmatprep.subr.bf16.mxu0 0
    %1769 = vmatpush1.bf16.msra.mxu0 0
    %1770 = vmatprep.subr.bf16.mxu0 0
    %1771 = vmatpush1.bf16.msra.mxu0 0
    %1772 = vmatprep.subr.bf16.mxu0 0
    %1773 = vmatpush1.bf16.msra.mxu0 0
    %1774 = vmatprep.subr.bf16.mxu0 0
    %1775 = vmatpush1.bf16.msra.mxu0 0
    %1776 = vmatprep.mubr.bf16.mxu0 0
    %1777 = vmatmul.mubr.bf16.gmra.mrb[0].mxu0 %v1742
    %v1778 = vpop.f32.mrb[0].mxu0
    %v1779 = vadd.f32 %v1673, %v1778
    %v1780 = vpop.f32.mrb[0].mxu0
    %v1781 = vpop.f32.mrb[0].mxu0
    %v1782 = vadd.f32 %v1673, %v1781
    %v1783 = vpop.f32.mrb[0].mxu0
    %1784 = vdwg.mxu0
    %v1785 = vtanh.pop %v1779
    %v1786 = vtanh.pop %v1782
    %v1787 = vpack.c.bf16 %v1786, %v1785
    %v1789 = vlaneseq
    %v1790 = vshrl.u32 %v1789, 7
    %v1791 = vsub.s32 0, %v1790
    %v1792 = vrot.slane %v321, %v1791
    %v1798 = vunpack.c.l.b16 %v317
    %v1799 = vunpack.c.l.b16 %v318
    %v1800 = vunpack.c.l.b16 %v319
    %v1801 = vunpack.c.l.b16 %v320
    %v1802 = vpack.c.b16 %v1799, %v1798
    %v1803 = vpack.c.b16 %v1801, %v1800
    %v1807 = vsel %vm510, %v1787, 0
    %1809 = vmatprep.subr.bf16.mxu0 0
    %1810 = vmatpush1.bf16.msra.mxu0 %v1802
    %1811 = vmatprep.subr.bf16.mxu0 0
    %1812 = vmatpush1.bf16.msra.mxu0 %v1803
    %1813 = vmatprep.subr.bf16.mxu0 0
    %1814 = vmatpush1.bf16.msra.mxu0 0
    %1815 = vmatprep.subr.bf16.mxu0 0
    %1816 = vmatpush1.bf16.msra.mxu0 0
    %1817 = vmatprep.subr.bf16.mxu0 0
    %1818 = vmatpush1.bf16.msra.mxu0 0
    %1819 = vmatprep.subr.bf16.mxu0 0
    %1820 = vmatpush1.bf16.msra.mxu0 0
    %1821 = vmatprep.subr.bf16.mxu0 0
    %1822 = vmatpush1.bf16.msra.mxu0 0
    %1823 = vmatprep.subr.bf16.mxu0 0
    %1824 = vmatpush1.bf16.msra.mxu0 0
    %1825 = vmatprep.subr.bf16.mxu0 0
    %1826 = vmatpush1.bf16.msra.mxu0 0
    %1827 = vmatprep.subr.bf16.mxu0 0
    %1828 = vmatpush1.bf16.msra.mxu0 0
    %1829 = vmatprep.subr.bf16.mxu0 0
    %1830 = vmatpush1.bf16.msra.mxu0 0
    %1831 = vmatprep.subr.bf16.mxu0 0
    %1832 = vmatpush1.bf16.msra.mxu0 0
    %1833 = vmatprep.subr.bf16.mxu0 0
    %1834 = vmatpush1.bf16.msra.mxu0 0
    %1835 = vmatprep.subr.bf16.mxu0 0
    %1836 = vmatpush1.bf16.msra.mxu0 0
    %1837 = vmatprep.subr.bf16.mxu0 0
    %1838 = vmatpush1.bf16.msra.mxu0 0
    %1839 = vmatprep.subr.bf16.mxu0 0
    %1840 = vmatpush1.bf16.msra.mxu0 0
    %1841 = vmatprep.mubr.bf16.mxu0 0
    %1842 = vmatmul.mubr.bf16.gmra.mrb[0].mxu0 %v1807
    %v1843 = vpop.f32.mrb[0].mxu0
    %v1844 = vadd.f32 %v1792, %v1843
    %v1845 = vpop.f32.mrb[0].mxu0
    %v1846 = vpop.f32.mrb[0].mxu0
    %v1847 = vadd.f32 %v1792, %v1846
    %v1848 = vpop.f32.mrb[0].mxu0
    %1849 = vdwg.mxu0
    %v1850 = vtanh.pop %v1844
    %v1851 = vtanh.pop %v1847
    %v1852 = vadd.f32 %v1850, %v145
    %v1853 = vadd.f32 %v1851, %v146
    %v1854 = vmul.f32 %v1852, %v156
    %v1855 = vmul.f32 %v1853, %v161
    %v1856 = vmul.f32 %v1854, %v156
    %v1857 = vmul.f32 %v1855, %v161
    %v1858 = vsel %vm510, %v1856, 0.0
    %v1859 = vrot.slane %v1858, 4
    %v1860 = vadd.f32 %v1858, %v1859
    %v1861 = vrot.slane %v1860, 2
    %v1862 = vadd.f32 %v1860, %v1861
    %v1863 = vrot.slane %v1862, 1
    %v1864 = vadd.f32 %v1862, %v1863
    %v1865 = vsel %vm510, %v1857, 0.0
    %v1866 = vrot.slane %v1865, 4
    %v1867 = vadd.f32 %v1865, %v1866
    %v1868 = vrot.slane %v1867, 2
    %v1869 = vadd.f32 %v1867, %v1868
    %v1870 = vrot.slane %v1869, 1
    %v1871 = vadd.f32 %v1869, %v1870
    %v1872 = vmul.f32 %v1864, 0.125
    %v1873 = vmul.f32 %v1871, 0.125
    %v1874 = vmax.f32 %v1872, 0.0
    %v1875 = vmax.f32 %v1873, 0.0
    %v1876 = vld [vmem:[%s17] sm:$0x1]
    %v1878 = vlaneseq
    %v1879 = vshrl.u32 %v1878, 7
    %v1880 = vsub.s32 0, %v1879
    %v1881 = vrot.slane %v1876, %v1880
    %v1883 = vmul.f32 %v1874, %v1881
    %v1884 = vmul.f32 %v1875, %v1881
    %v1887 = vrot.slane %v1884, 7
    %v1888 = vsel %vm1707, %v1887, %v1883
    %vm1890 = vcmask 254976
    %v1891 = vsel %vm1890, %v1888, 0.0
    %1892 = vadd.xlane.f32.xlu0 %v1891
    %v1893 = vpop.xlane.xlu0 %1892
    %v1894 = vld [vmem:[#allocation3] sm:$0x1]
    %v1896 = vlaneseq
    %v1897 = vshrl.u32 %v1896, 7
    %v1898 = vsub.s32 0, %v1897
    %v1899 = vrot.slane %v1894, %v1898
    %v1901 = vadd.f32 %v1893, %v1899
    %v1904 = vunpack.c.l.s4 1966171168
    %v1905 = vunpack.c.0.s8 %v1904
    %v1906 = vlaneseq
    %v1907 = vshrl.u32 %v1906, 7
    %v1908 = vsub.s32 %v1905, %v1907
    %v1909 = vrot.slane %v1901, %v1908
    %v1910 = vcombine.high %v1909, %v1909
    %v1912 = vunpack.c.l.s4 1966171168
    %v1913 = vunpack.c.0.s8 %v1912
    %v1914 = vlaneseq
    %v1915 = vshrl.u32 %v1914, 7
    %v1916 = vsub.s32 %v1913, %v1915
    %v1917 = vrot.slane %v1909, %v1916
    %v1919 = vunpack.c.l.s4 1966171168
    %v1920 = vunpack.c.0.s8 %v1919
    %v1921 = vlaneseq
    %v1922 = vshrl.u32 %v1921, 7
    %v1923 = vsub.s32 %v1920, %v1922
    %v1924 = vrot.slane %v1910, %v1923
    %vm1927 = vcmask 0
    %1928 = vst.msk [vmem:[%s19] sm:$0x1] %vm1927, %v1917
    %1929 = vst.msk [vmem:[%s19 + $0x1] sm:$0x1] %vm1927, %v1924
    // Predicated region
    $region102: #{tpu_custom_call.1} parent=1 // pred_check
      _
    $region103: #{tpu_custom_call.1} parent=1 // pred_check_branch
      %1931 = sbr.rel (0) target = $region105
    $region104: #{tpu_custom_call.1} parent=1 // pred_region
      _
    $region105: #{tpu_custom_call.1} parent=1 // pred_fallthru
      _
    // Predicated region
    $region106: #{tpu_custom_call.1} parent=1 // pred_check
      _
    $region107: #{tpu_custom_call.1} parent=1 // pred_check_branch
      %1933 = sbr.rel (0) target = $region109
    $region108: #{tpu_custom_call.1} parent=1 // pred_region
      _
    $region109: #{tpu_custom_call.1} parent=1 // pred_fallthru
      _
    %1934 = vsyncpa [#allocation5], 1
    %1935 = vsyncpa [#allocation7], 1
    %1936 = vsyncpa [#allocation10], 1
    %1937 = vsyncpa [#allocation13], 1

</llo_original>
